<compile_context>
chip_gen: v7x
topology: tpu7x:2x2x1
jax: 0.10.0
libtpu: 0.0.40
codegen_flags: <defaults>
</compile_context>

<pallas_src>
import math

import jax
import jax.numpy as jnp
from jax import lax
from jax.experimental import pallas as pl
from jax.experimental.pallas import tpu as pltpu

HIDDEN = 32              # hidden_size
SEQ = 8                  # sequence_len (small demo value; module default 999)
NG = 4 * HIDDEN          # 128 gate lanes (PyTorch gate order [i, f, g, o])
F1 = 128                 # fc1 width
F2 = 128                 # fc2 width
NOUT = 4                 # abcd
OUT_PAD = 128            # lane-dense padded output width


def _softplus(x):
    # matches torch.nn.Softplus(beta=1, threshold=20)
    return jnp.where(x > 20.0, x, jnp.log(1.0 + jnp.exp(jnp.minimum(x, 20.0))))


def model1_kernel(x_ref, wih0_ref, b0_ref, gmul_ref, gadd_ref,
                  w0cat_ref, whh1_ref, b1_ref, w1_ref,
                  bf1_ref, w2_ref, bf2_ref, w3_ref, bf3_ref,
                  out_ref, xproj_scr, h1_scr):
    H = HIDDEN
    gmul = gmul_ref[...]            # (1, NG)  [0.5, 0.5, 1.0, 0.5] per band
    gadd = gadd_ref[...]            # (1, NG)  [0.5, 0.5, 0.0, 0.5] per band
    b1 = b1_ref[...]                # (1, NG)  b_ih_l1 + b_hh_l1
    w0cat = w0cat_ref[...]          # (H, 2*NG) bf16  [whh0 | wih1]
    whh1 = whh1_ref[...]            # (H, NG)   bf16

    # Layer-0 input projection for the whole sequence.  K=2 -> two VPU rank-1
    # FMAs (no f32 MXU matmul).  Staged in a VMEM scratch and read one row per
    # step so vreg pressure stays flat when sequence_len=999.
    x = x_ref[...]                  # (SEQ, 2)
    wih0 = wih0_ref[...]            # (2, NG)
    xproj_scr[...] = (x[:, 0:1] * wih0[0:1, :] + x[:, 1:2] * wih0[1:2, :]
                      + b0_ref[...])
    # TODO(synk): at sequence_len=999 chunk this precompute (e.g. 128 rows at
    # a time) so the (SEQ, NG) intermediate is never live as a single value.

    def cell(g, c):
        # One full-width tanh on the 128-lane gate vreg replaces 3 sigmoids
        # (exp + divide) and 1 tanh on 32-lane slices.
        t = jnp.tanh(g * gmul)
        a = t * gmul + gadd                       # [ i | f | g~ | o ] bands
        i = a[:, 0:H]
        f = a[:, H:2 * H]
        gg = a[:, 2 * H:3 * H]
        o = a[:, 3 * H:4 * H]
        c_new = f * c + i * gg
        return o * jnp.tanh(c_new), c_new

    # TODO(synk): stage the constant recurrent RHS (w0cat, whh1) in MXU weight
    # registers once per sequence via pltpu.matmul_push_rhs and per step only
    # push LHS / pop (pltpu.matmul_acc_lhs / matmul_pop); on v7x additionally
    # accumulate the fc1 half in the MRB.  Kept on jnp.dot here to guarantee
    # portable lowering on v5e/v6e/v7x.
    def step(t, carry):
        c0, c1, rec0, rec1 = carry
        xp = xproj_scr[pl.ds(t, 1), :]                        # (1, NG)
        # ---- layer 0 cell ----
        h0, c0 = cell(xp + rec0, c0)
        # One bf16 MXU push gives both h0@whh0 (next step) and h0@wih1 (now).
        fused0 = jnp.dot(h0.astype(jnp.bfloat16), w0cat,
                         preferred_element_type=jnp.float32)  # (1, 2*NG)
        rec0 = fused0[:, 0:NG]
        # ---- layer 1 cell ----
        h1, c1 = cell(fused0[:, NG:2 * NG] + rec1, c1)
        rec1 = jnp.dot(h1.astype(jnp.bfloat16), whh1,
                       preferred_element_type=jnp.float32) + b1
        # Stash h1 for the post-loop fc1 contraction.
        h1_scr[pl.ds(t, 1), :] = h1
        return c0, c1, rec0, rec1

    zeros_h = jnp.zeros((1, H), jnp.float32)
    init = (zeros_h, zeros_h, jnp.zeros((1, NG), jnp.float32), b1)
    # unroll=True fully unrolls at SEQ=8 (straight-line code for the LLO
    # scheduler).  TODO(synk): for sequence_len=999 use unroll=4..8 and skew
    # the schedule one stage (carry h0/rec0 one step ahead) so layer-0
    # EUP/VPU work of step t+1 overlaps the layer-1 MXU work of step t.
    _ = lax.fori_loop(0, SEQ, step, init, unroll=True)

    # fc1 pre-activation: contraction over K = SEQ*H done AFTER the recurrence
    # (off the per-step serial chain).  whh1 is no longer broadcast into this
    # weight, so w1 is only the true fc1 weight.
    # TODO(synk): at sequence_len=999 stream w1 over K with a gridded
    # BlockSpec / pltpu.emit_pipeline instead of keeping it VMEM-resident.
    def fc1_step(t, acc):
        h1 = h1_scr[pl.ds(t, 1), :].astype(jnp.bfloat16)      # (1, H)
        return acc + jnp.dot(h1, w1_ref[t],
                             preferred_element_type=jnp.float32)

    acc = lax.fori_loop(0, SEQ, fc1_step, bf1_ref[...], unroll=True)

    # FC head (Dropout layers are identity in eval mode); bf16 MXU operands
    # with f32 accumulation; all lane-dense (4-wide output zero-padded to 128,
    # sliced back in the wrapper).
    fc1 = _softplus(acc)
    fc2 = _softplus(jnp.dot(fc1.astype(jnp.bfloat16), w2_ref[...],
                            preferred_element_type=jnp.float32) + bf2_ref[...])
    out_ref[...] = jnp.dot(fc2.astype(jnp.bfloat16), w3_ref[...],
                           preferred_element_type=jnp.float32) + bf3_ref[...]


def model1_forward(data, kp):
    """data: (1, SEQ, 2) batch_first (batch must be 1, implied by out.flatten())."""
    x = data[0].astype(jnp.float32)                      # (SEQ, 2)
    order = ('wih0', 'b0', 'gmul', 'gadd', 'w0cat', 'whh1', 'b1', 'w1',
             'bf1', 'w2', 'bf2', 'w3', 'bf3')
    args = (x,) + tuple(kp[k] for k in order)
    vmem = pl.BlockSpec(memory_space=pltpu.MemorySpace.VMEM)
    abcd_pad = pl.pallas_call(
        model1_kernel,
        out_shape=jax.ShapeDtypeStruct((1, OUT_PAD), jnp.float32),
        in_specs=[vmem] * len(args),
        out_specs=vmem,
        scratch_shapes=[pltpu.VMEM((SEQ, NG), jnp.float32),     # xproj stash
                        pltpu.VMEM((SEQ, HIDDEN), jnp.float32)],  # h1 stash
        # Explicit VMEM budget (all demo buffers << 1 MiB).  TODO(synk):
        # re-derive for sequence_len=999 (fc1 weight alone is ~8.2 MiB bf16)
        # vs. v5e's 16 MiB scoped default / v7x's 64 MiB physical VMEM.
        compiler_params=pltpu.CompilerParams(
            vmem_limit_bytes=16 * 1024 * 1024),
    )(*args)
    # TODO(synk): explicit_euler(data, abcd) is defined outside Model1 and was
    # not provided; returning abcd (== self.abcd[None, :]) instead of y_pred.
    # TODO(synk): on v7x, batch independent sequences (or run two kernel
    # instances via core_map) to use the second TensorCore; a single batch-1
    # recurrence cannot profitably split across cores.
    return abcd_pad[:, :NOUT]


def init_raw_params(key, hidden=HIDDEN, seq=SEQ):
    """PyTorch-layout f32 params with U(-1/sqrt(fan), 1/sqrt(fan)) init."""
    H = hidden
    k = jax.random.split(key, 14)

    def u(kk, shape, scale):
        return jax.random.uniform(kk, shape, jnp.float32, -scale, scale)

    s = 1.0 / math.sqrt(H)
    raw = dict(
        w_ih_l0=u(k[0], (4 * H, 2), s), w_hh_l0=u(k[1], (4 * H, H), s),
        b_ih_l0=u(k[2], (4 * H,), s), b_hh_l0=u(k[3], (4 * H,), s),
        w_ih_l1=u(k[4], (4 * H, H), s), w_hh_l1=u(k[5], (4 * H, H), s),
        b_ih_l1=u(k[6], (4 * H,), s), b_hh_l1=u(k[7], (4 * H,), s),
    )
    in_features = seq * H
    s1 = 1.0 / math.sqrt(in_features)
    raw['fc1_w'] = u(k[8], (F1, in_features), s1)
    raw['fc1_b'] = u(k[9], (F1,), s1)
    s2 = 1.0 / math.sqrt(F1)
    raw['fc2_w'] = u(k[10], (F2, F1), s2)
    raw['fc2_b'] = u(k[11], (F2,), s2)
    s3 = 1.0 / math.sqrt(F2)
    raw['fc3_w'] = u(k[12], (NOUT, F2), s3)
    raw['fc3_b'] = u(k[13], (NOUT,), s3)
    return raw


def pack_params(raw):
    """Pre-transpose / fuse / bf16-pack weights into the kernel layout."""
    H = HIDDEN
    b0 = raw['b_ih_l0'] + raw['b_hh_l0']
    b1 = raw['b_ih_l1'] + raw['b_hh_l1']

    # [whh0 | wih1]  (H, 2*NG) bf16 — constant recurrent/input RHS, layer 0->1
    w0cat = jnp.concatenate([raw['w_hh_l0'].T, raw['w_ih_l1'].T],
                            axis=1).astype(jnp.bfloat16)
    # whh1 as its OWN constant (no per-t broadcast anymore).
    whh1 = raw['w_hh_l1'].T.astype(jnp.bfloat16)              # (H, NG)
    # fc1 weight, t-major to match out.flatten(): (SEQ, H, F1) bf16
    w1 = raw['fc1_w'].T.reshape(SEQ, H, F1).astype(jnp.bfloat16)

    band = jnp.arange(NG) // H
    gmul = jnp.where(band == 2, 1.0, 0.5).astype(jnp.float32)[None, :]
    gadd = jnp.where(band == 2, 0.0, 0.5).astype(jnp.float32)[None, :]

    # Zero-padded lane-dense head output (columns 4..127 MUST stay zero).
    w3p = jnp.zeros((F2, OUT_PAD), jnp.float32).at[:, :NOUT].set(
        raw['fc3_w'].T).astype(jnp.bfloat16)
    bf3p = jnp.zeros((1, OUT_PAD), jnp.float32).at[:, :NOUT].set(raw['fc3_b'])

    return dict(
        wih0=raw['w_ih_l0'].T,                     # (2, NG) f32
        b0=b0[None, :],                            # (1, NG) f32
        gmul=gmul, gadd=gadd,                      # (1, NG) f32
        w0cat=w0cat,                               # (H, 2*NG) bf16
        whh1=whh1,                                 # (H, NG)   bf16
        b1=b1[None, :],                            # (1, NG)   f32
        w1=w1,                                     # (SEQ, H, F1) bf16
        bf1=raw['fc1_b'][None, :],                 # (1, F1) f32
        w2=raw['fc2_w'].T.astype(jnp.bfloat16),    # (F1, F2) bf16
        bf2=raw['fc2_b'][None, :],                 # (1, F2) f32
        w3=w3p,                                    # (F2, OUT_PAD) bf16, padded
        bf3=bf3p,                                  # (1, OUT_PAD) f32, padded
    )


def model1_reference(data, raw):
    """Pure-JAX f32 reference matching the PyTorch eval-mode forward (abcd)."""
    H = HIDDEN
    x = data[0].astype(jnp.float32)
    wih0, whh0 = raw['w_ih_l0'].T, raw['w_hh_l0'].T
    wih1, whh1 = raw['w_ih_l1'].T, raw['w_hh_l1'].T
    b0 = (raw['b_ih_l0'] + raw['b_hh_l0'])[None, :]
    b1 = (raw['b_ih_l1'] + raw['b_hh_l1'])[None, :]

    def cell(g, c):
        i = jax.nn.sigmoid(g[:, :H])
        f = jax.nn.sigmoid(g[:, H:2 * H])
        gg = jnp.tanh(g[:, 2 * H:3 * H])
        o = jax.nn.sigmoid(g[:, 3 * H:])
        c = f * c + i * gg
        return o * jnp.tanh(c), c

    h0 = c0 = h1 = c1 = jnp.zeros((1, H), jnp.float32)
    outs = []
    for t in range(SEQ):
        h0, c0 = cell(x[t:t + 1] @ wih0 + b0 + h0 @ whh0, c0)
        h1, c1 = cell(h0 @ wih1 + b1 + h1 @ whh1, c1)
        outs.append(h1)
    flat = jnp.concatenate(outs, axis=1)                     # (1, SEQ*H)
    fc1 = jax.nn.softplus(flat @ raw['fc1_w'].T + raw['fc1_b'])
    fc2 = jax.nn.softplus(fc1 @ raw['fc2_w'].T + raw['fc2_b'])
    return fc2 @ raw['fc3_w'].T + raw['fc3_b']


if __name__ == "__main__":
    key = jax.random.PRNGKey(0)
    kd, kw = jax.random.split(key)
    data = jax.random.normal(kd, (1, SEQ, 2), jnp.float32)   # X (batch_first, batch=1)
    raw = init_raw_params(kw)
    kp = pack_params(raw)

    abcd = jax.block_until_ready(model1_forward(data, kp))
    ref = model1_reference(data, raw)

    assert abcd.shape == (1, NOUT), abcd.shape
    # bf16 MXU operands on the recurrence + head -> slightly looser tolerance
    # than pure f32.
    assert jnp.allclose(abcd, ref, rtol=2e-2, atol=2e-2), (abcd, ref)
    print("KERNEL_OK")
</pallas_src>

<mosaic_0001>
module attributes {stable_mosaic.version = 11 : i64} {
  func.func @model1_kernel(%arg0: memref<8x2xf32, #tpu.memory_space<vmem>>, %arg1: memref<2x128xf32, #tpu.memory_space<vmem>>, %arg2: memref<1x128xf32, #tpu.memory_space<vmem>>, %arg3: memref<1x128xf32, #tpu.memory_space<vmem>>, %arg4: memref<1x128xf32, #tpu.memory_space<vmem>>, %arg5: memref<32x256xbf16, #tpu.memory_space<vmem>>, %arg6: memref<32x128xbf16, #tpu.memory_space<vmem>>, %arg7: memref<1x128xf32, #tpu.memory_space<vmem>>, %arg8: memref<8x32x128xbf16, #tpu.memory_space<vmem>>, %arg9: memref<1x128xf32, #tpu.memory_space<vmem>>, %arg10: memref<128x128xbf16, #tpu.memory_space<vmem>>, %arg11: memref<1x128xf32, #tpu.memory_space<vmem>>, %arg12: memref<128x128xbf16, #tpu.memory_space<vmem>>, %arg13: memref<1x128xf32, #tpu.memory_space<vmem>>, %arg14: memref<1x128xf32, #tpu.memory_space<vmem>>, %arg15: memref<8x128xf32, #tpu.memory_space<vmem>>, %arg16: memref<8x32xf32, #tpu.memory_space<vmem>>) attributes {dimension_semantics = [], scalar_prefetch = 0 : i64, scratch_operands = 2 : i64, tpu.core_type = #tpu.core_type<tc>} {
    %c0 = arith.constant 0 : index
    %c0_0 = arith.constant 0 : index
    %0 = vector.load %arg3[%c0, %c0_0] : memref<1x128xf32, #tpu.memory_space<vmem>>, vector<1x128xf32>
    %c0_1 = arith.constant 0 : index
    %c0_2 = arith.constant 0 : index
    %1 = vector.load %arg4[%c0_1, %c0_2] : memref<1x128xf32, #tpu.memory_space<vmem>>, vector<1x128xf32>
    %c0_3 = arith.constant 0 : index
    %c0_4 = arith.constant 0 : index
    %2 = vector.load %arg7[%c0_3, %c0_4] : memref<1x128xf32, #tpu.memory_space<vmem>>, vector<1x128xf32>
    %c0_5 = arith.constant 0 : index
    %c0_6 = arith.constant 0 : index
    %3 = vector.load %arg5[%c0_5, %c0_6] : memref<32x256xbf16, #tpu.memory_space<vmem>>, vector<32x256xbf16>
    %c0_7 = arith.constant 0 : index
    %c0_8 = arith.constant 0 : index
    %4 = vector.load %arg6[%c0_7, %c0_8] : memref<32x128xbf16, #tpu.memory_space<vmem>>, vector<32x128xbf16>
    %c0_9 = arith.constant 0 : index
    %c0_10 = arith.constant 0 : index
    %5 = vector.load %arg0[%c0_9, %c0_10] : memref<8x2xf32, #tpu.memory_space<vmem>>, vector<8x2xf32>
    %c0_11 = arith.constant 0 : index
    %c0_12 = arith.constant 0 : index
    %6 = vector.load %arg1[%c0_11, %c0_12] : memref<2x128xf32, #tpu.memory_space<vmem>>, vector<2x128xf32>
    %7 = vector.extract_strided_slice %5 {offsets = [0, 0], sizes = [8, 1], strides = [1, 1]} : vector<8x2xf32> to vector<8x1xf32>
    %8 = vector.extract_strided_slice %6 {offsets = [0, 0], sizes = [1, 128], strides = [1, 1]} : vector<2x128xf32> to vector<1x128xf32>
    %9 = vector.broadcast %7 : vector<8x1xf32> to vector<8x128xf32>
    %10 = vector.broadcast %8 : vector<1x128xf32> to vector<8x128xf32>
    %11 = arith.mulf %9, %10 : vector<8x128xf32>
    %12 = vector.extract_strided_slice %5 {offsets = [0, 1], sizes = [8, 1], strides = [1, 1]} : vector<8x2xf32> to vector<8x1xf32>
    %13 = vector.extract_strided_slice %6 {offsets = [1, 0], sizes = [1, 128], strides = [1, 1]} : vector<2x128xf32> to vector<1x128xf32>
    %14 = vector.broadcast %12 : vector<8x1xf32> to vector<8x128xf32>
    %15 = vector.broadcast %13 : vector<1x128xf32> to vector<8x128xf32>
    %16 = arith.mulf %14, %15 : vector<8x128xf32>
    %17 = arith.addf %11, %16 : vector<8x128xf32>
    %c0_13 = arith.constant 0 : index
    %c0_14 = arith.constant 0 : index
    %18 = vector.load %arg2[%c0_13, %c0_14] : memref<1x128xf32, #tpu.memory_space<vmem>>, vector<1x128xf32>
    %19 = vector.broadcast %18 : vector<1x128xf32> to vector<8x128xf32>
    %20 = arith.addf %17, %19 : vector<8x128xf32>
    %c0_15 = arith.constant 0 : index
    %c0_16 = arith.constant 0 : index
    %21 = vector.load %arg15[%c0_15, %c0_16] : memref<8x128xf32, #tpu.memory_space<vmem>>, vector<8x128xf32>
    tpu.vector_store %arg15[%c0_15, %c0_16], %20 {strides = array<i32>} : memref<8x128xf32, #tpu.memory_space<vmem>>, vector<8x128xf32>,
    %cst = arith.constant 0.000000e+00 : f32
    %22 = vector.broadcast %cst : f32 to vector<1x32xf32>
    %cst_17 = arith.constant 0.000000e+00 : f32
    %23 = vector.broadcast %cst_17 : f32 to vector<1x128xf32>
    %c0_i32 = arith.constant 0 : i32
    %24 = arith.index_cast %c0_i32 : i32 to index
    %c0_18 = arith.constant 0 : index
    %25 = vector.load %arg15[%24, %c0_18] : memref<8x128xf32, #tpu.memory_space<vmem>>, vector<1x128xf32>
    %26 = arith.addf %25, %23 : vector<1x128xf32>
    %27 = arith.mulf %26, %0 : vector<1x128xf32>
    %28 = math.tanh %27 : vector<1x128xf32>
    %29 = arith.mulf %28, %0 : vector<1x128xf32>
    %30 = arith.addf %29, %1 : vector<1x128xf32>
    %31 = vector.extract_strided_slice %30 {offsets = [0, 0], sizes = [1, 32], strides = [1, 1]} : vector<1x128xf32> to vector<1x32xf32>
    %32 = vector.extract_strided_slice %30 {offsets = [0, 32], sizes = [1, 32], strides = [1, 1]} : vector<1x128xf32> to vector<1x32xf32>
    %33 = vector.extract_strided_slice %30 {offsets = [0, 64], sizes = [1, 32], strides = [1, 1]} : vector<1x128xf32> to vector<1x32xf32>
    %34 = vector.extract_strided_slice %30 {offsets = [0, 96], sizes = [1, 32], strides = [1, 1]} : vector<1x128xf32> to vector<1x32xf32>
    %35 = arith.mulf %32, %22 : vector<1x32xf32>
    %36 = arith.mulf %31, %33 : vector<1x32xf32>
    %37 = arith.addf %35, %36 : vector<1x32xf32>
    %38 = math.tanh %37 : vector<1x32xf32>
    %39 = arith.mulf %34, %38 : vector<1x32xf32>
    %40 = arith.truncf %39 : vector<1x32xf32> to vector<1x32xbf16>
    %cst_19 = arith.constant dense<0.000000e+00> : vector<1x256xf32>
    %41 = tpu.matmul %40, %3, %cst_19 {dimension_numbers = #tpu.dot_dimension_numbers<[1], [0], [0], [1], [0, 0, 1, 1], [], []>} : vector<1x32xbf16>, vector<32x256xbf16>, vector<1x256xf32> -> vector<1x256xf32>
    %42 = vector.extract_strided_slice %41 {offsets = [0, 0], sizes = [1, 128], strides = [1, 1]} : vector<1x256xf32> to vector<1x128xf32>
    %43 = vector.extract_strided_slice %41 {offsets = [0, 128], sizes = [1, 128], strides = [1, 1]} : vector<1x256xf32> to vector<1x128xf32>
    %44 = arith.addf %43, %2 : vector<1x128xf32>
    %45 = arith.mulf %44, %0 : vector<1x128xf32>
    %46 = math.tanh %45 : vector<1x128xf32>
    %47 = arith.mulf %46, %0 : vector<1x128xf32>
    %48 = arith.addf %47, %1 : vector<1x128xf32>
    %49 = vector.extract_strided_slice %48 {offsets = [0, 0], sizes = [1, 32], strides = [1, 1]} : vector<1x128xf32> to vector<1x32xf32>
    %50 = vector.extract_strided_slice %48 {offsets = [0, 32], sizes = [1, 32], strides = [1, 1]} : vector<1x128xf32> to vector<1x32xf32>
    %51 = vector.extract_strided_slice %48 {offsets = [0, 64], sizes = [1, 32], strides = [1, 1]} : vector<1x128xf32> to vector<1x32xf32>
    %52 = vector.extract_strided_slice %48 {offsets = [0, 96], sizes = [1, 32], strides = [1, 1]} : vector<1x128xf32> to vector<1x32xf32>
    %53 = arith.mulf %50, %22 : vector<1x32xf32>
    %54 = arith.mulf %49, %51 : vector<1x32xf32>
    %55 = arith.addf %53, %54 : vector<1x32xf32>
    %56 = math.tanh %55 : vector<1x32xf32>
    %57 = arith.mulf %52, %56 : vector<1x32xf32>
    %58 = arith.truncf %57 : vector<1x32xf32> to vector<1x32xbf16>
    %cst_20 = arith.constant dense<0.000000e+00> : vector<1x128xf32>
    %59 = tpu.matmul %58, %4, %cst_20 {dimension_numbers = #tpu.dot_dimension_numbers<[1], [0], [0], [1], [0, 0, 1, 1], [], []>} : vector<1x32xbf16>, vector<32x128xbf16>, vector<1x128xf32> -> vector<1x128xf32>
    %60 = arith.addf %59, %2 : vector<1x128xf32>
    %61 = arith.index_cast %c0_i32 : i32 to index
    %c0_21 = arith.constant 0 : index
    %62 = vector.load %arg16[%61, %c0_21] : memref<8x32xf32, #tpu.memory_space<vmem>>, vector<1x32xf32>
    tpu.vector_store %arg16[%61, %c0_21], %57 {strides = array<i32>} : memref<8x32xf32, #tpu.memory_space<vmem>>, vector<1x32xf32>,
    %c1_i32 = arith.constant 1 : i32
    %63 = arith.index_cast %c1_i32 : i32 to index
    %c0_22 = arith.constant 0 : index
    %64 = vector.load %arg15[%63, %c0_22] : memref<8x128xf32, #tpu.memory_space<vmem>>, vector<1x128xf32>
    %65 = arith.addf %64, %42 : vector<1x128xf32>
    %66 = arith.mulf %65, %0 : vector<1x128xf32>
    %67 = math.tanh %66 : vector<1x128xf32>
    %68 = arith.mulf %67, %0 : vector<1x128xf32>
    %69 = arith.addf %68, %1 : vector<1x128xf32>
    %70 = vector.extract_strided_slice %69 {offsets = [0, 0], sizes = [1, 32], strides = [1, 1]} : vector<1x128xf32> to vector<1x32xf32>
    %71 = vector.extract_strided_slice %69 {offsets = [0, 32], sizes = [1, 32], strides = [1, 1]} : vector<1x128xf32> to vector<1x32xf32>
    %72 = vector.extract_strided_slice %69 {offsets = [0, 64], sizes = [1, 32], strides = [1, 1]} : vector<1x128xf32> to vector<1x32xf32>
    %73 = vector.extract_strided_slice %69 {offsets = [0, 96], sizes = [1, 32], strides = [1, 1]} : vector<1x128xf32> to vector<1x32xf32>
    %74 = arith.mulf %71, %37 : vector<1x32xf32>
    %75 = arith.mulf %70, %72 : vector<1x32xf32>
    %76 = arith.addf %74, %75 : vector<1x32xf32>
    %77 = math.tanh %76 : vector<1x32xf32>
    %78 = arith.mulf %73, %77 : vector<1x32xf32>
    %79 = arith.truncf %78 : vector<1x32xf32> to vector<1x32xbf16>
    %cst_23 = arith.constant dense<0.000000e+00> : vector<1x256xf32>
    %80 = tpu.matmul %79, %3, %cst_23 {dimension_numbers = #tpu.dot_dimension_numbers<[1], [0], [0], [1], [0, 0, 1, 1], [], []>} : vector<1x32xbf16>, vector<32x256xbf16>, vector<1x256xf32> -> vector<1x256xf32>
    %81 = vector.extract_strided_slice %80 {offsets = [0, 0], sizes = [1, 128], strides = [1, 1]} : vector<1x256xf32> to vector<1x128xf32>
    %82 = vector.extract_strided_slice %80 {offsets = [0, 128], sizes = [1, 128], strides = [1, 1]} : vector<1x256xf32> to vector<1x128xf32>
    %83 = arith.addf %82, %60 : vector<1x128xf32>
    %84 = arith.mulf %83, %0 : vector<1x128xf32>
    %85 = math.tanh %84 : vector<1x128xf32>
    %86 = arith.mulf %85, %0 : vector<1x128xf32>
    %87 = arith.addf %86, %1 : vector<1x128xf32>
    %88 = vector.extract_strided_slice %87 {offsets = [0, 0], sizes = [1, 32], strides = [1, 1]} : vector<1x128xf32> to vector<1x32xf32>
    %89 = vector.extract_strided_slice %87 {offsets = [0, 32], sizes = [1, 32], strides = [1, 1]} : vector<1x128xf32> to vector<1x32xf32>
    %90 = vector.extract_strided_slice %87 {offsets = [0, 64], sizes = [1, 32], strides = [1, 1]} : vector<1x128xf32> to vector<1x32xf32>
    %91 = vector.extract_strided_slice %87 {offsets = [0, 96], sizes = [1, 32], strides = [1, 1]} : vector<1x128xf32> to vector<1x32xf32>
    %92 = arith.mulf %89, %55 : vector<1x32xf32>
    %93 = arith.mulf %88, %90 : vector<1x32xf32>
    %94 = arith.addf %92, %93 : vector<1x32xf32>
    %95 = math.tanh %94 : vector<1x32xf32>
    %96 = arith.mulf %91, %95 : vector<1x32xf32>
    %97 = arith.truncf %96 : vector<1x32xf32> to vector<1x32xbf16>
    %cst_24 = arith.constant dense<0.000000e+00> : vector<1x128xf32>
    %98 = tpu.matmul %97, %4, %cst_24 {dimension_numbers = #tpu.dot_dimension_numbers<[1], [0], [0], [1], [0, 0, 1, 1], [], []>} : vector<1x32xbf16>, vector<32x128xbf16>, vector<1x128xf32> -> vector<1x128xf32>
    %99 = arith.addf %98, %2 : vector<1x128xf32>
    %100 = arith.index_cast %c1_i32 : i32 to index
    %c0_25 = arith.constant 0 : index
    %101 = vector.load %arg16[%100, %c0_25] : memref<8x32xf32, #tpu.memory_space<vmem>>, vector<1x32xf32>
    tpu.vector_store %arg16[%100, %c0_25], %96 {strides = array<i32>} : memref<8x32xf32, #tpu.memory_space<vmem>>, vector<1x32xf32>,
    %c2_i32 = arith.constant 2 : i32
    %102 = arith.index_cast %c2_i32 : i32 to index
    %c0_26 = arith.constant 0 : index
    %103 = vector.load %arg15[%102, %c0_26] : memref<8x128xf32, #tpu.memory_space<vmem>>, vector<1x128xf32>
    %104 = arith.addf %103, %81 : vector<1x128xf32>
    %105 = arith.mulf %104, %0 : vector<1x128xf32>
    %106 = math.tanh %105 : vector<1x128xf32>
    %107 = arith.mulf %106, %0 : vector<1x128xf32>
    %108 = arith.addf %107, %1 : vector<1x128xf32>
    %109 = vector.extract_strided_slice %108 {offsets = [0, 0], sizes = [1, 32], strides = [1, 1]} : vector<1x128xf32> to vector<1x32xf32>
    %110 = vector.extract_strided_slice %108 {offsets = [0, 32], sizes = [1, 32], strides = [1, 1]} : vector<1x128xf32> to vector<1x32xf32>
    %111 = vector.extract_strided_slice %108 {offsets = [0, 64], sizes = [1, 32], strides = [1, 1]} : vector<1x128xf32> to vector<1x32xf32>
    %112 = vector.extract_strided_slice %108 {offsets = [0, 96], sizes = [1, 32], strides = [1, 1]} : vector<1x128xf32> to vector<1x32xf32>
    %113 = arith.mulf %110, %76 : vector<1x32xf32>
    %114 = arith.mulf %109, %111 : vector<1x32xf32>
    %115 = arith.addf %113, %114 : vector<1x32xf32>
    %116 = math.tanh %115 : vector<1x32xf32>
    %117 = arith.mulf %112, %116 : vector<1x32xf32>
    %118 = arith.truncf %117 : vector<1x32xf32> to vector<1x32xbf16>
    %cst_27 = arith.constant dense<0.000000e+00> : vector<1x256xf32>
    %119 = tpu.matmul %118, %3, %cst_27 {dimension_numbers = #tpu.dot_dimension_numbers<[1], [0], [0], [1], [0, 0, 1, 1], [], []>} : vector<1x32xbf16>, vector<32x256xbf16>, vector<1x256xf32> -> vector<1x256xf32>
    %120 = vector.extract_strided_slice %119 {offsets = [0, 0], sizes = [1, 128], strides = [1, 1]} : vector<1x256xf32> to vector<1x128xf32>
    %121 = vector.extract_strided_slice %119 {offsets = [0, 128], sizes = [1, 128], strides = [1, 1]} : vector<1x256xf32> to vector<1x128xf32>
    %122 = arith.addf %121, %99 : vector<1x128xf32>
    %123 = arith.mulf %122, %0 : vector<1x128xf32>
    %124 = math.tanh %123 : vector<1x128xf32>
    %125 = arith.mulf %124, %0 : vector<1x128xf32>
    %126 = arith.addf %125, %1 : vector<1x128xf32>
    %127 = vector.extract_strided_slice %126 {offsets = [0, 0], sizes = [1, 32], strides = [1, 1]} : vector<1x128xf32> to vector<1x32xf32>
    %128 = vector.extract_strided_slice %126 {offsets = [0, 32], sizes = [1, 32], strides = [1, 1]} : vector<1x128xf32> to vector<1x32xf32>
    %129 = vector.extract_strided_slice %126 {offsets = [0, 64], sizes = [1, 32], strides = [1, 1]} : vector<1x128xf32> to vector<1x32xf32>
    %130 = vector.extract_strided_slice %126 {offsets = [0, 96], sizes = [1, 32], strides = [1, 1]} : vector<1x128xf32> to vector<1x32xf32>
    %131 = arith.mulf %128, %94 : vector<1x32xf32>
    %132 = arith.mulf %127, %129 : vector<1x32xf32>
    %133 = arith.addf %131, %132 : vector<1x32xf32>
    %134 = math.tanh %133 : vector<1x32xf32>
    %135 = arith.mulf %130, %134 : vector<1x32xf32>
    %136 = arith.truncf %135 : vector<1x32xf32> to vector<1x32xbf16>
    %cst_28 = arith.constant dense<0.000000e+00> : vector<1x128xf32>
    %137 = tpu.matmul %136, %4, %cst_28 {dimension_numbers = #tpu.dot_dimension_numbers<[1], [0], [0], [1], [0, 0, 1, 1], [], []>} : vector<1x32xbf16>, vector<32x128xbf16>, vector<1x128xf32> -> vector<1x128xf32>
    %138 = arith.addf %137, %2 : vector<1x128xf32>
    %139 = arith.index_cast %c2_i32 : i32 to index
    %c0_29 = arith.constant 0 : index
    %140 = vector.load %arg16[%139, %c0_29] : memref<8x32xf32, #tpu.memory_space<vmem>>, vector<1x32xf32>
    tpu.vector_store %arg16[%139, %c0_29], %135 {strides = array<i32>} : memref<8x32xf32, #tpu.memory_space<vmem>>, vector<1x32xf32>,
    %c3_i32 = arith.constant 3 : i32
    %141 = arith.index_cast %c3_i32 : i32 to index
    %c0_30 = arith.constant 0 : index
    %142 = vector.load %arg15[%141, %c0_30] : memref<8x128xf32, #tpu.memory_space<vmem>>, vector<1x128xf32>
    %143 = arith.addf %142, %120 : vector<1x128xf32>
    %144 = arith.mulf %143, %0 : vector<1x128xf32>
    %145 = math.tanh %144 : vector<1x128xf32>
    %146 = arith.mulf %145, %0 : vector<1x128xf32>
    %147 = arith.addf %146, %1 : vector<1x128xf32>
    %148 = vector.extract_strided_slice %147 {offsets = [0, 0], sizes = [1, 32], strides = [1, 1]} : vector<1x128xf32> to vector<1x32xf32>
    %149 = vector.extract_strided_slice %147 {offsets = [0, 32], sizes = [1, 32], strides = [1, 1]} : vector<1x128xf32> to vector<1x32xf32>
    %150 = vector.extract_strided_slice %147 {offsets = [0, 64], sizes = [1, 32], strides = [1, 1]} : vector<1x128xf32> to vector<1x32xf32>
    %151 = vector.extract_strided_slice %147 {offsets = [0, 96], sizes = [1, 32], strides = [1, 1]} : vector<1x128xf32> to vector<1x32xf32>
    %152 = arith.mulf %149, %115 : vector<1x32xf32>
    %153 = arith.mulf %148, %150 : vector<1x32xf32>
    %154 = arith.addf %152, %153 : vector<1x32xf32>
    %155 = math.tanh %154 : vector<1x32xf32>
    %156 = arith.mulf %151, %155 : vector<1x32xf32>
    %157 = arith.truncf %156 : vector<1x32xf32> to vector<1x32xbf16>
    %cst_31 = arith.constant dense<0.000000e+00> : vector<1x256xf32>
    %158 = tpu.matmul %157, %3, %cst_31 {dimension_numbers = #tpu.dot_dimension_numbers<[1], [0], [0], [1], [0, 0, 1, 1], [], []>} : vector<1x32xbf16>, vector<32x256xbf16>, vector<1x256xf32> -> vector<1x256xf32>
    %159 = vector.extract_strided_slice %158 {offsets = [0, 0], sizes = [1, 128], strides = [1, 1]} : vector<1x256xf32> to vector<1x128xf32>
    %160 = vector.extract_strided_slice %158 {offsets = [0, 128], sizes = [1, 128], strides = [1, 1]} : vector<1x256xf32> to vector<1x128xf32>
    %161 = arith.addf %160, %138 : vector<1x128xf32>
    %162 = arith.mulf %161, %0 : vector<1x128xf32>
    %163 = math.tanh %162 : vector<1x128xf32>
    %164 = arith.mulf %163, %0 : vector<1x128xf32>
    %165 = arith.addf %164, %1 : vector<1x128xf32>
    %166 = vector.extract_strided_slice %165 {offsets = [0, 0], sizes = [1, 32], strides = [1, 1]} : vector<1x128xf32> to vector<1x32xf32>
    %167 = vector.extract_strided_slice %165 {offsets = [0, 32], sizes = [1, 32], strides = [1, 1]} : vector<1x128xf32> to vector<1x32xf32>
    %168 = vector.extract_strided_slice %165 {offsets = [0, 64], sizes = [1, 32], strides = [1, 1]} : vector<1x128xf32> to vector<1x32xf32>
    %169 = vector.extract_strided_slice %165 {offsets = [0, 96], sizes = [1, 32], strides = [1, 1]} : vector<1x128xf32> to vector<1x32xf32>
    %170 = arith.mulf %167, %133 : vector<1x32xf32>
    %171 = arith.mulf %166, %168 : vector<1x32xf32>
    %172 = arith.addf %170, %171 : vector<1x32xf32>
    %173 = math.tanh %172 : vector<1x32xf32>
    %174 = arith.mulf %169, %173 : vector<1x32xf32>
    %175 = arith.truncf %174 : vector<1x32xf32> to vector<1x32xbf16>
    %cst_32 = arith.constant dense<0.000000e+00> : vector<1x128xf32>
    %176 = tpu.matmul %175, %4, %cst_32 {dimension_numbers = #tpu.dot_dimension_numbers<[1], [0], [0], [1], [0, 0, 1, 1], [], []>} : vector<1x32xbf16>, vector<32x128xbf16>, vector<1x128xf32> -> vector<1x128xf32>
    %177 = arith.addf %176, %2 : vector<1x128xf32>
    %178 = arith.index_cast %c3_i32 : i32 to index
    %c0_33 = arith.constant 0 : index
    %179 = vector.load %arg16[%178, %c0_33] : memref<8x32xf32, #tpu.memory_space<vmem>>, vector<1x32xf32>
    tpu.vector_store %arg16[%178, %c0_33], %174 {strides = array<i32>} : memref<8x32xf32, #tpu.memory_space<vmem>>, vector<1x32xf32>,
    %c4_i32 = arith.constant 4 : i32
    %180 = arith.index_cast %c4_i32 : i32 to index
    %c0_34 = arith.constant 0 : index
    %181 = vector.load %arg15[%180, %c0_34] : memref<8x128xf32, #tpu.memory_space<vmem>>, vector<1x128xf32>
    %182 = arith.addf %181, %159 : vector<1x128xf32>
    %183 = arith.mulf %182, %0 : vector<1x128xf32>
    %184 = math.tanh %183 : vector<1x128xf32>
    %185 = arith.mulf %184, %0 : vector<1x128xf32>
    %186 = arith.addf %185, %1 : vector<1x128xf32>
    %187 = vector.extract_strided_slice %186 {offsets = [0, 0], sizes = [1, 32], strides = [1, 1]} : vector<1x128xf32> to vector<1x32xf32>
    %188 = vector.extract_strided_slice %186 {offsets = [0, 32], sizes = [1, 32], strides = [1, 1]} : vector<1x128xf32> to vector<1x32xf32>
    %189 = vector.extract_strided_slice %186 {offsets = [0, 64], sizes = [1, 32], strides = [1, 1]} : vector<1x128xf32> to vector<1x32xf32>
    %190 = vector.extract_strided_slice %186 {offsets = [0, 96], sizes = [1, 32], strides = [1, 1]} : vector<1x128xf32> to vector<1x32xf32>
    %191 = arith.mulf %188, %154 : vector<1x32xf32>
    %192 = arith.mulf %187, %189 : vector<1x32xf32>
    %193 = arith.addf %191, %192 : vector<1x32xf32>
    %194 = math.tanh %193 : vector<1x32xf32>
    %195 = arith.mulf %190, %194 : vector<1x32xf32>
    %196 = arith.truncf %195 : vector<1x32xf32> to vector<1x32xbf16>
    %cst_35 = arith.constant dense<0.000000e+00> : vector<1x256xf32>
    %197 = tpu.matmul %196, %3, %cst_35 {dimension_numbers = #tpu.dot_dimension_numbers<[1], [0], [0], [1], [0, 0, 1, 1], [], []>} : vector<1x32xbf16>, vector<32x256xbf16>, vector<1x256xf32> -> vector<1x256xf32>
    %198 = vector.extract_strided_slice %197 {offsets = [0, 0], sizes = [1, 128], strides = [1, 1]} : vector<1x256xf32> to vector<1x128xf32>
    %199 = vector.extract_strided_slice %197 {offsets = [0, 128], sizes = [1, 128], strides = [1, 1]} : vector<1x256xf32> to vector<1x128xf32>
    %200 = arith.addf %199, %177 : vector<1x128xf32>
    %201 = arith.mulf %200, %0 : vector<1x128xf32>
    %202 = math.tanh %201 : vector<1x128xf32>
    %203 = arith.mulf %202, %0 : vector<1x128xf32>
    %204 = arith.addf %203, %1 : vector<1x128xf32>
    %205 = vector.extract_strided_slice %204 {offsets = [0, 0], sizes = [1, 32], strides = [1, 1]} : vector<1x128xf32> to vector<1x32xf32>
    %206 = vector.extract_strided_slice %204 {offsets = [0, 32], sizes = [1, 32], strides = [1, 1]} : vector<1x128xf32> to vector<1x32xf32>
    %207 = vector.extract_strided_slice %204 {offsets = [0, 64], sizes = [1, 32], strides = [1, 1]} : vector<1x128xf32> to vector<1x32xf32>
    %208 = vector.extract_strided_slice %204 {offsets = [0, 96], sizes = [1, 32], strides = [1, 1]} : vector<1x128xf32> to vector<1x32xf32>
    %209 = arith.mulf %206, %172 : vector<1x32xf32>
    %210 = arith.mulf %205, %207 : vector<1x32xf32>
    %211 = arith.addf %209, %210 : vector<1x32xf32>
    %212 = math.tanh %211 : vector<1x32xf32>
    %213 = arith.mulf %208, %212 : vector<1x32xf32>
    %214 = arith.truncf %213 : vector<1x32xf32> to vector<1x32xbf16>
    %cst_36 = arith.constant dense<0.000000e+00> : vector<1x128xf32>
    %215 = tpu.matmul %214, %4, %cst_36 {dimension_numbers = #tpu.dot_dimension_numbers<[1], [0], [0], [1], [0, 0, 1, 1], [], []>} : vector<1x32xbf16>, vector<32x128xbf16>, vector<1x128xf32> -> vector<1x128xf32>
    %216 = arith.addf %215, %2 : vector<1x128xf32>
    %217 = arith.index_cast %c4_i32 : i32 to index
    %c0_37 = arith.constant 0 : index
    %218 = vector.load %arg16[%217, %c0_37] : memref<8x32xf32, #tpu.memory_space<vmem>>, vector<1x32xf32>
    tpu.vector_store %arg16[%217, %c0_37], %213 {strides = array<i32>} : memref<8x32xf32, #tpu.memory_space<vmem>>, vector<1x32xf32>,
    %c5_i32 = arith.constant 5 : i32
    %219 = arith.index_cast %c5_i32 : i32 to index
    %c0_38 = arith.constant 0 : index
    %220 = vector.load %arg15[%219, %c0_38] : memref<8x128xf32, #tpu.memory_space<vmem>>, vector<1x128xf32>
    %221 = arith.addf %220, %198 : vector<1x128xf32>
    %222 = arith.mulf %221, %0 : vector<1x128xf32>
    %223 = math.tanh %222 : vector<1x128xf32>
    %224 = arith.mulf %223, %0 : vector<1x128xf32>
    %225 = arith.addf %224, %1 : vector<1x128xf32>
    %226 = vector.extract_strided_slice %225 {offsets = [0, 0], sizes = [1, 32], strides = [1, 1]} : vector<1x128xf32> to vector<1x32xf32>
    %227 = vector.extract_strided_slice %225 {offsets = [0, 32], sizes = [1, 32], strides = [1, 1]} : vector<1x128xf32> to vector<1x32xf32>
    %228 = vector.extract_strided_slice %225 {offsets = [0, 64], sizes = [1, 32], strides = [1, 1]} : vector<1x128xf32> to vector<1x32xf32>
    %229 = vector.extract_strided_slice %225 {offsets = [0, 96], sizes = [1, 32], strides = [1, 1]} : vector<1x128xf32> to vector<1x32xf32>
    %230 = arith.mulf %227, %193 : vector<1x32xf32>
    %231 = arith.mulf %226, %228 : vector<1x32xf32>
    %232 = arith.addf %230, %231 : vector<1x32xf32>
    %233 = math.tanh %232 : vector<1x32xf32>
    %234 = arith.mulf %229, %233 : vector<1x32xf32>
    %235 = arith.truncf %234 : vector<1x32xf32> to vector<1x32xbf16>
    %cst_39 = arith.constant dense<0.000000e+00> : vector<1x256xf32>
    %236 = tpu.matmul %235, %3, %cst_39 {dimension_numbers = #tpu.dot_dimension_numbers<[1], [0], [0], [1], [0, 0, 1, 1], [], []>} : vector<1x32xbf16>, vector<32x256xbf16>, vector<1x256xf32> -> vector<1x256xf32>
    %237 = vector.extract_strided_slice %236 {offsets = [0, 0], sizes = [1, 128], strides = [1, 1]} : vector<1x256xf32> to vector<1x128xf32>
    %238 = vector.extract_strided_slice %236 {offsets = [0, 128], sizes = [1, 128], strides = [1, 1]} : vector<1x256xf32> to vector<1x128xf32>
    %239 = arith.addf %238, %216 : vector<1x128xf32>
    %240 = arith.mulf %239, %0 : vector<1x128xf32>
    %241 = math.tanh %240 : vector<1x128xf32>
    %242 = arith.mulf %241, %0 : vector<1x128xf32>
    %243 = arith.addf %242, %1 : vector<1x128xf32>
    %244 = vector.extract_strided_slice %243 {offsets = [0, 0], sizes = [1, 32], strides = [1, 1]} : vector<1x128xf32> to vector<1x32xf32>
    %245 = vector.extract_strided_slice %243 {offsets = [0, 32], sizes = [1, 32], strides = [1, 1]} : vector<1x128xf32> to vector<1x32xf32>
    %246 = vector.extract_strided_slice %243 {offsets = [0, 64], sizes = [1, 32], strides = [1, 1]} : vector<1x128xf32> to vector<1x32xf32>
    %247 = vector.extract_strided_slice %243 {offsets = [0, 96], sizes = [1, 32], strides = [1, 1]} : vector<1x128xf32> to vector<1x32xf32>
    %248 = arith.mulf %245, %211 : vector<1x32xf32>
    %249 = arith.mulf %244, %246 : vector<1x32xf32>
    %250 = arith.addf %248, %249 : vector<1x32xf32>
    %251 = math.tanh %250 : vector<1x32xf32>
    %252 = arith.mulf %247, %251 : vector<1x32xf32>
    %253 = arith.truncf %252 : vector<1x32xf32> to vector<1x32xbf16>
    %cst_40 = arith.constant dense<0.000000e+00> : vector<1x128xf32>
    %254 = tpu.matmul %253, %4, %cst_40 {dimension_numbers = #tpu.dot_dimension_numbers<[1], [0], [0], [1], [0, 0, 1, 1], [], []>} : vector<1x32xbf16>, vector<32x128xbf16>, vector<1x128xf32> -> vector<1x128xf32>
    %255 = arith.addf %254, %2 : vector<1x128xf32>
    %256 = arith.index_cast %c5_i32 : i32 to index
    %c0_41 = arith.constant 0 : index
    %257 = vector.load %arg16[%256, %c0_41] : memref<8x32xf32, #tpu.memory_space<vmem>>, vector<1x32xf32>
    tpu.vector_store %arg16[%256, %c0_41], %252 {strides = array<i32>} : memref<8x32xf32, #tpu.memory_space<vmem>>, vector<1x32xf32>,
    %c6_i32 = arith.constant 6 : i32
    %258 = arith.index_cast %c6_i32 : i32 to index
    %c0_42 = arith.constant 0 : index
    %259 = vector.load %arg15[%258, %c0_42] : memref<8x128xf32, #tpu.memory_space<vmem>>, vector<1x128xf32>
    %260 = arith.addf %259, %237 : vector<1x128xf32>
    %261 = arith.mulf %260, %0 : vector<1x128xf32>
    %262 = math.tanh %261 : vector<1x128xf32>
    %263 = arith.mulf %262, %0 : vector<1x128xf32>
    %264 = arith.addf %263, %1 : vector<1x128xf32>
    %265 = vector.extract_strided_slice %264 {offsets = [0, 0], sizes = [1, 32], strides = [1, 1]} : vector<1x128xf32> to vector<1x32xf32>
    %266 = vector.extract_strided_slice %264 {offsets = [0, 32], sizes = [1, 32], strides = [1, 1]} : vector<1x128xf32> to vector<1x32xf32>
    %267 = vector.extract_strided_slice %264 {offsets = [0, 64], sizes = [1, 32], strides = [1, 1]} : vector<1x128xf32> to vector<1x32xf32>
    %268 = vector.extract_strided_slice %264 {offsets = [0, 96], sizes = [1, 32], strides = [1, 1]} : vector<1x128xf32> to vector<1x32xf32>
    %269 = arith.mulf %266, %232 : vector<1x32xf32>
    %270 = arith.mulf %265, %267 : vector<1x32xf32>
    %271 = arith.addf %269, %270 : vector<1x32xf32>
    %272 = math.tanh %271 : vector<1x32xf32>
    %273 = arith.mulf %268, %272 : vector<1x32xf32>
    %274 = arith.truncf %273 : vector<1x32xf32> to vector<1x32xbf16>
    %cst_43 = arith.constant dense<0.000000e+00> : vector<1x256xf32>
    %275 = tpu.matmul %274, %3, %cst_43 {dimension_numbers = #tpu.dot_dimension_numbers<[1], [0], [0], [1], [0, 0, 1, 1], [], []>} : vector<1x32xbf16>, vector<32x256xbf16>, vector<1x256xf32> -> vector<1x256xf32>
    %276 = vector.extract_strided_slice %275 {offsets = [0, 0], sizes = [1, 128], strides = [1, 1]} : vector<1x256xf32> to vector<1x128xf32>
    %277 = vector.extract_strided_slice %275 {offsets = [0, 128], sizes = [1, 128], strides = [1, 1]} : vector<1x256xf32> to vector<1x128xf32>
    %278 = arith.addf %277, %255 : vector<1x128xf32>
    %279 = arith.mulf %278, %0 : vector<1x128xf32>
    %280 = math.tanh %279 : vector<1x128xf32>
    %281 = arith.mulf %280, %0 : vector<1x128xf32>
    %282 = arith.addf %281, %1 : vector<1x128xf32>
    %283 = vector.extract_strided_slice %282 {offsets = [0, 0], sizes = [1, 32], strides = [1, 1]} : vector<1x128xf32> to vector<1x32xf32>
    %284 = vector.extract_strided_slice %282 {offsets = [0, 32], sizes = [1, 32], strides = [1, 1]} : vector<1x128xf32> to vector<1x32xf32>
    %285 = vector.extract_strided_slice %282 {offsets = [0, 64], sizes = [1, 32], strides = [1, 1]} : vector<1x128xf32> to vector<1x32xf32>
    %286 = vector.extract_strided_slice %282 {offsets = [0, 96], sizes = [1, 32], strides = [1, 1]} : vector<1x128xf32> to vector<1x32xf32>
    %287 = arith.mulf %284, %250 : vector<1x32xf32>
    %288 = arith.mulf %283, %285 : vector<1x32xf32>
    %289 = arith.addf %287, %288 : vector<1x32xf32>
    %290 = math.tanh %289 : vector<1x32xf32>
    %291 = arith.mulf %286, %290 : vector<1x32xf32>
    %292 = arith.truncf %291 : vector<1x32xf32> to vector<1x32xbf16>
    %cst_44 = arith.constant dense<0.000000e+00> : vector<1x128xf32>
    %293 = tpu.matmul %292, %4, %cst_44 {dimension_numbers = #tpu.dot_dimension_numbers<[1], [0], [0], [1], [0, 0, 1, 1], [], []>} : vector<1x32xbf16>, vector<32x128xbf16>, vector<1x128xf32> -> vector<1x128xf32>
    %294 = arith.addf %293, %2 : vector<1x128xf32>
    %295 = arith.index_cast %c6_i32 : i32 to index
    %c0_45 = arith.constant 0 : index
    %296 = vector.load %arg16[%295, %c0_45] : memref<8x32xf32, #tpu.memory_space<vmem>>, vector<1x32xf32>
    tpu.vector_store %arg16[%295, %c0_45], %291 {strides = array<i32>} : memref<8x32xf32, #tpu.memory_space<vmem>>, vector<1x32xf32>,
    %c7_i32 = arith.constant 7 : i32
    %297 = arith.index_cast %c7_i32 : i32 to index
    %c0_46 = arith.constant 0 : index
    %298 = vector.load %arg15[%297, %c0_46] : memref<8x128xf32, #tpu.memory_space<vmem>>, vector<1x128xf32>
    %299 = arith.addf %298, %276 : vector<1x128xf32>
    %300 = arith.mulf %299, %0 : vector<1x128xf32>
    %301 = math.tanh %300 : vector<1x128xf32>
    %302 = arith.mulf %301, %0 : vector<1x128xf32>
    %303 = arith.addf %302, %1 : vector<1x128xf32>
    %304 = vector.extract_strided_slice %303 {offsets = [0, 0], sizes = [1, 32], strides = [1, 1]} : vector<1x128xf32> to vector<1x32xf32>
    %305 = vector.extract_strided_slice %303 {offsets = [0, 32], sizes = [1, 32], strides = [1, 1]} : vector<1x128xf32> to vector<1x32xf32>
    %306 = vector.extract_strided_slice %303 {offsets = [0, 64], sizes = [1, 32], strides = [1, 1]} : vector<1x128xf32> to vector<1x32xf32>
    %307 = vector.extract_strided_slice %303 {offsets = [0, 96], sizes = [1, 32], strides = [1, 1]} : vector<1x128xf32> to vector<1x32xf32>
    %308 = arith.mulf %305, %271 : vector<1x32xf32>
    %309 = arith.mulf %304, %306 : vector<1x32xf32>
    %310 = arith.addf %308, %309 : vector<1x32xf32>
    %311 = math.tanh %310 : vector<1x32xf32>
    %312 = arith.mulf %307, %311 : vector<1x32xf32>
    %313 = arith.truncf %312 : vector<1x32xf32> to vector<1x32xbf16>
    %cst_47 = arith.constant dense<0.000000e+00> : vector<1x256xf32>
    %314 = tpu.matmul %313, %3, %cst_47 {dimension_numbers = #tpu.dot_dimension_numbers<[1], [0], [0], [1], [0, 0, 1, 1], [], []>} : vector<1x32xbf16>, vector<32x256xbf16>, vector<1x256xf32> -> vector<1x256xf32>
    %315 = vector.extract_strided_slice %314 {offsets = [0, 0], sizes = [1, 128], strides = [1, 1]} : vector<1x256xf32> to vector<1x128xf32>
    %316 = vector.extract_strided_slice %314 {offsets = [0, 128], sizes = [1, 128], strides = [1, 1]} : vector<1x256xf32> to vector<1x128xf32>
    %317 = arith.addf %316, %294 : vector<1x128xf32>
    %318 = arith.mulf %317, %0 : vector<1x128xf32>
    %319 = math.tanh %318 : vector<1x128xf32>
    %320 = arith.mulf %319, %0 : vector<1x128xf32>
    %321 = arith.addf %320, %1 : vector<1x128xf32>
    %322 = vector.extract_strided_slice %321 {offsets = [0, 0], sizes = [1, 32], strides = [1, 1]} : vector<1x128xf32> to vector<1x32xf32>
    %323 = vector.extract_strided_slice %321 {offsets = [0, 32], sizes = [1, 32], strides = [1, 1]} : vector<1x128xf32> to vector<1x32xf32>
    %324 = vector.extract_strided_slice %321 {offsets = [0, 64], sizes = [1, 32], strides = [1, 1]} : vector<1x128xf32> to vector<1x32xf32>
    %325 = vector.extract_strided_slice %321 {offsets = [0, 96], sizes = [1, 32], strides = [1, 1]} : vector<1x128xf32> to vector<1x32xf32>
    %326 = arith.mulf %323, %289 : vector<1x32xf32>
    %327 = arith.mulf %322, %324 : vector<1x32xf32>
    %328 = arith.addf %326, %327 : vector<1x32xf32>
    %329 = math.tanh %328 : vector<1x32xf32>
    %330 = arith.mulf %325, %329 : vector<1x32xf32>
    %331 = arith.truncf %330 : vector<1x32xf32> to vector<1x32xbf16>
    %cst_48 = arith.constant dense<0.000000e+00> : vector<1x128xf32>
    %332 = tpu.matmul %331, %4, %cst_48 {dimension_numbers = #tpu.dot_dimension_numbers<[1], [0], [0], [1], [0, 0, 1, 1], [], []>} : vector<1x32xbf16>, vector<32x128xbf16>, vector<1x128xf32> -> vector<1x128xf32>
    %333 = arith.addf %332, %2 : vector<1x128xf32>
    %334 = arith.index_cast %c7_i32 : i32 to index
    %c0_49 = arith.constant 0 : index
    %335 = vector.load %arg16[%334, %c0_49] : memref<8x32xf32, #tpu.memory_space<vmem>>, vector<1x32xf32>
    tpu.vector_store %arg16[%334, %c0_49], %330 {strides = array<i32>} : memref<8x32xf32, #tpu.memory_space<vmem>>, vector<1x32xf32>,
    %c8_i32 = arith.constant 8 : i32
    %c0_50 = arith.constant 0 : index
    %c0_51 = arith.constant 0 : index
    %336 = vector.load %arg9[%c0_50, %c0_51] : memref<1x128xf32, #tpu.memory_space<vmem>>, vector<1x128xf32>
    %c0_i32_52 = arith.constant 0 : i32
    %337 = arith.index_cast %c0_i32_52 : i32 to index
    %c0_53 = arith.constant 0 : index
    %338 = vector.load %arg16[%337, %c0_53] : memref<8x32xf32, #tpu.memory_space<vmem>>, vector<1x32xf32>
    %339 = arith.truncf %338 : vector<1x32xf32> to vector<1x32xbf16>
    %340 = arith.index_cast %c0_i32_52 : i32 to index
    %c0_54 = arith.constant 0 : index
    %c0_55 = arith.constant 0 : index
    %341 = vector.load %arg8[%340, %c0_54, %c0_55] : memref<8x32x128xbf16, #tpu.memory_space<vmem>>, vector<1x32x128xbf16>
    %342 = vector.shape_cast %341 : vector<1x32x128xbf16> to vector<32x128xbf16>
    %cst_56 = arith.constant dense<0.000000e+00> : vector<1x128xf32>
    %343 = tpu.matmul %339, %342, %cst_56 {dimension_numbers = #tpu.dot_dimension_numbers<[1], [0], [0], [1], [0, 0, 1, 1], [], []>} : vector<1x32xbf16>, vector<32x128xbf16>, vector<1x128xf32> -> vector<1x128xf32>
    %344 = arith.addf %336, %343 : vector<1x128xf32>
    %c1_i32_57 = arith.constant 1 : i32
    %345 = arith.index_cast %c1_i32_57 : i32 to index
    %c0_58 = arith.constant 0 : index
    %346 = vector.load %arg16[%345, %c0_58] : memref<8x32xf32, #tpu.memory_space<vmem>>, vector<1x32xf32>
    %347 = arith.truncf %346 : vector<1x32xf32> to vector<1x32xbf16>
    %348 = arith.index_cast %c1_i32_57 : i32 to index
    %c0_59 = arith.constant 0 : index
    %c0_60 = arith.constant 0 : index
    %349 = vector.load %arg8[%348, %c0_59, %c0_60] : memref<8x32x128xbf16, #tpu.memory_space<vmem>>, vector<1x32x128xbf16>
    %350 = vector.shape_cast %349 : vector<1x32x128xbf16> to vector<32x128xbf16>
    %cst_61 = arith.constant dense<0.000000e+00> : vector<1x128xf32>
    %351 = tpu.matmul %347, %350, %cst_61 {dimension_numbers = #tpu.dot_dimension_numbers<[1], [0], [0], [1], [0, 0, 1, 1], [], []>} : vector<1x32xbf16>, vector<32x128xbf16>, vector<1x128xf32> -> vector<1x128xf32>
    %352 = arith.addf %344, %351 : vector<1x128xf32>
    %c2_i32_62 = arith.constant 2 : i32
    %353 = arith.index_cast %c2_i32_62 : i32 to index
    %c0_63 = arith.constant 0 : index
    %354 = vector.load %arg16[%353, %c0_63] : memref<8x32xf32, #tpu.memory_space<vmem>>, vector<1x32xf32>
    %355 = arith.truncf %354 : vector<1x32xf32> to vector<1x32xbf16>
    %356 = arith.index_cast %c2_i32_62 : i32 to index
    %c0_64 = arith.constant 0 : index
    %c0_65 = arith.constant 0 : index
    %357 = vector.load %arg8[%356, %c0_64, %c0_65] : memref<8x32x128xbf16, #tpu.memory_space<vmem>>, vector<1x32x128xbf16>
    %358 = vector.shape_cast %357 : vector<1x32x128xbf16> to vector<32x128xbf16>
    %cst_66 = arith.constant dense<0.000000e+00> : vector<1x128xf32>
    %359 = tpu.matmul %355, %358, %cst_66 {dimension_numbers = #tpu.dot_dimension_numbers<[1], [0], [0], [1], [0, 0, 1, 1], [], []>} : vector<1x32xbf16>, vector<32x128xbf16>, vector<1x128xf32> -> vector<1x128xf32>
    %360 = arith.addf %352, %359 : vector<1x128xf32>
    %c3_i32_67 = arith.constant 3 : i32
    %361 = arith.index_cast %c3_i32_67 : i32 to index
    %c0_68 = arith.constant 0 : index
    %362 = vector.load %arg16[%361, %c0_68] : memref<8x32xf32, #tpu.memory_space<vmem>>, vector<1x32xf32>
    %363 = arith.truncf %362 : vector<1x32xf32> to vector<1x32xbf16>
    %364 = arith.index_cast %c3_i32_67 : i32 to index
    %c0_69 = arith.constant 0 : index
    %c0_70 = arith.constant 0 : index
    %365 = vector.load %arg8[%364, %c0_69, %c0_70] : memref<8x32x128xbf16, #tpu.memory_space<vmem>>, vector<1x32x128xbf16>
    %366 = vector.shape_cast %365 : vector<1x32x128xbf16> to vector<32x128xbf16>
    %cst_71 = arith.constant dense<0.000000e+00> : vector<1x128xf32>
    %367 = tpu.matmul %363, %366, %cst_71 {dimension_numbers = #tpu.dot_dimension_numbers<[1], [0], [0], [1], [0, 0, 1, 1], [], []>} : vector<1x32xbf16>, vector<32x128xbf16>, vector<1x128xf32> -> vector<1x128xf32>
    %368 = arith.addf %360, %367 : vector<1x128xf32>
    %c4_i32_72 = arith.constant 4 : i32
    %369 = arith.index_cast %c4_i32_72 : i32 to index
    %c0_73 = arith.constant 0 : index
    %370 = vector.load %arg16[%369, %c0_73] : memref<8x32xf32, #tpu.memory_space<vmem>>, vector<1x32xf32>
    %371 = arith.truncf %370 : vector<1x32xf32> to vector<1x32xbf16>
    %372 = arith.index_cast %c4_i32_72 : i32 to index
    %c0_74 = arith.constant 0 : index
    %c0_75 = arith.constant 0 : index
    %373 = vector.load %arg8[%372, %c0_74, %c0_75] : memref<8x32x128xbf16, #tpu.memory_space<vmem>>, vector<1x32x128xbf16>
    %374 = vector.shape_cast %373 : vector<1x32x128xbf16> to vector<32x128xbf16>
    %cst_76 = arith.constant dense<0.000000e+00> : vector<1x128xf32>
    %375 = tpu.matmul %371, %374, %cst_76 {dimension_numbers = #tpu.dot_dimension_numbers<[1], [0], [0], [1], [0, 0, 1, 1], [], []>} : vector<1x32xbf16>, vector<32x128xbf16>, vector<1x128xf32> -> vector<1x128xf32>
    %376 = arith.addf %368, %375 : vector<1x128xf32>
    %c5_i32_77 = arith.constant 5 : i32
    %377 = arith.index_cast %c5_i32_77 : i32 to index
    %c0_78 = arith.constant 0 : index
    %378 = vector.load %arg16[%377, %c0_78] : memref<8x32xf32, #tpu.memory_space<vmem>>, vector<1x32xf32>
    %379 = arith.truncf %378 : vector<1x32xf32> to vector<1x32xbf16>
    %380 = arith.index_cast %c5_i32_77 : i32 to index
    %c0_79 = arith.constant 0 : index
    %c0_80 = arith.constant 0 : index
    %381 = vector.load %arg8[%380, %c0_79, %c0_80] : memref<8x32x128xbf16, #tpu.memory_space<vmem>>, vector<1x32x128xbf16>
    %382 = vector.shape_cast %381 : vector<1x32x128xbf16> to vector<32x128xbf16>
    %cst_81 = arith.constant dense<0.000000e+00> : vector<1x128xf32>
    %383 = tpu.matmul %379, %382, %cst_81 {dimension_numbers = #tpu.dot_dimension_numbers<[1], [0], [0], [1], [0, 0, 1, 1], [], []>} : vector<1x32xbf16>, vector<32x128xbf16>, vector<1x128xf32> -> vector<1x128xf32>
    %384 = arith.addf %376, %383 : vector<1x128xf32>
    %c6_i32_82 = arith.constant 6 : i32
    %385 = arith.index_cast %c6_i32_82 : i32 to index
    %c0_83 = arith.constant 0 : index
    %386 = vector.load %arg16[%385, %c0_83] : memref<8x32xf32, #tpu.memory_space<vmem>>, vector<1x32xf32>
    %387 = arith.truncf %386 : vector<1x32xf32> to vector<1x32xbf16>
    %388 = arith.index_cast %c6_i32_82 : i32 to index
    %c0_84 = arith.constant 0 : index
    %c0_85 = arith.constant 0 : index
    %389 = vector.load %arg8[%388, %c0_84, %c0_85] : memref<8x32x128xbf16, #tpu.memory_space<vmem>>, vector<1x32x128xbf16>
    %390 = vector.shape_cast %389 : vector<1x32x128xbf16> to vector<32x128xbf16>
    %cst_86 = arith.constant dense<0.000000e+00> : vector<1x128xf32>
    %391 = tpu.matmul %387, %390, %cst_86 {dimension_numbers = #tpu.dot_dimension_numbers<[1], [0], [0], [1], [0, 0, 1, 1], [], []>} : vector<1x32xbf16>, vector<32x128xbf16>, vector<1x128xf32> -> vector<1x128xf32>
    %392 = arith.addf %384, %391 : vector<1x128xf32>
    %c7_i32_87 = arith.constant 7 : i32
    %393 = arith.index_cast %c7_i32_87 : i32 to index
    %c0_88 = arith.constant 0 : index
    %394 = vector.load %arg16[%393, %c0_88] : memref<8x32xf32, #tpu.memory_space<vmem>>, vector<1x32xf32>
    %395 = arith.truncf %394 : vector<1x32xf32> to vector<1x32xbf16>
    %396 = arith.index_cast %c7_i32_87 : i32 to index
    %c0_89 = arith.constant 0 : index
    %c0_90 = arith.constant 0 : index
    %397 = vector.load %arg8[%396, %c0_89, %c0_90] : memref<8x32x128xbf16, #tpu.memory_space<vmem>>, vector<1x32x128xbf16>
    %398 = vector.shape_cast %397 : vector<1x32x128xbf16> to vector<32x128xbf16>
    %cst_91 = arith.constant dense<0.000000e+00> : vector<1x128xf32>
    %399 = tpu.matmul %395, %398, %cst_91 {dimension_numbers = #tpu.dot_dimension_numbers<[1], [0], [0], [1], [0, 0, 1, 1], [], []>} : vector<1x32xbf16>, vector<32x128xbf16>, vector<1x128xf32> -> vector<1x128xf32>
    %400 = arith.addf %392, %399 : vector<1x128xf32>
    %c8_i32_92 = arith.constant 8 : i32
    %cst_93 = arith.constant 2.000000e+01 : f32
    %401 = vector.broadcast %cst_93 : f32 to vector<1x128xf32>
    %402 = arith.cmpf ogt, %400, %401 : vector<1x128xf32>
    %cst_94 = arith.constant 2.000000e+01 : f32
    %403 = vector.broadcast %cst_94 : f32 to vector<1x128xf32>
    %404 = arith.minimumf %400, %403 : vector<1x128xf32>
    %405 = math.exp %404 : vector<1x128xf32>
    %cst_95 = arith.constant 1.000000e+00 : f32
    %406 = vector.broadcast %cst_95 : f32 to vector<1x128xf32>
    %407 = arith.addf %406, %405 : vector<1x128xf32>
    %408 = math.log %407 : vector<1x128xf32>
    %409 = arith.select %402, %400, %408 : vector<1x128xi1>, vector<1x128xf32>
    %410 = arith.truncf %409 : vector<1x128xf32> to vector<1x128xbf16>
    %c0_96 = arith.constant 0 : index
    %c0_97 = arith.constant 0 : index
    %411 = vector.load %arg10[%c0_96, %c0_97] : memref<128x128xbf16, #tpu.memory_space<vmem>>, vector<128x128xbf16>
    %cst_98 = arith.constant dense<0.000000e+00> : vector<1x128xf32>
    %412 = tpu.matmul %410, %411, %cst_98 {dimension_numbers = #tpu.dot_dimension_numbers<[1], [0], [0], [1], [0, 0, 1, 1], [], []>} : vector<1x128xbf16>, vector<128x128xbf16>, vector<1x128xf32> -> vector<1x128xf32>
    %c0_99 = arith.constant 0 : index
    %c0_100 = arith.constant 0 : index
    %413 = vector.load %arg11[%c0_99, %c0_100] : memref<1x128xf32, #tpu.memory_space<vmem>>, vector<1x128xf32>
    %414 = arith.addf %412, %413 : vector<1x128xf32>
    %cst_101 = arith.constant 2.000000e+01 : f32
    %415 = vector.broadcast %cst_101 : f32 to vector<1x128xf32>
    %416 = arith.cmpf ogt, %414, %415 : vector<1x128xf32>
    %cst_102 = arith.constant 2.000000e+01 : f32
    %417 = vector.broadcast %cst_102 : f32 to vector<1x128xf32>
    %418 = arith.minimumf %414, %417 : vector<1x128xf32>
    %419 = math.exp %418 : vector<1x128xf32>
    %cst_103 = arith.constant 1.000000e+00 : f32
    %420 = vector.broadcast %cst_103 : f32 to vector<1x128xf32>
    %421 = arith.addf %420, %419 : vector<1x128xf32>
    %422 = math.log %421 : vector<1x128xf32>
    %423 = arith.select %416, %414, %422 : vector<1x128xi1>, vector<1x128xf32>
    %424 = arith.truncf %423 : vector<1x128xf32> to vector<1x128xbf16>
    %c0_104 = arith.constant 0 : index
    %c0_105 = arith.constant 0 : index
    %425 = vector.load %arg12[%c0_104, %c0_105] : memref<128x128xbf16, #tpu.memory_space<vmem>>, vector<128x128xbf16>
    %cst_106 = arith.constant dense<0.000000e+00> : vector<1x128xf32>
    %426 = tpu.matmul %424, %425, %cst_106 {dimension_numbers = #tpu.dot_dimension_numbers<[1], [0], [0], [1], [0, 0, 1, 1], [], []>} : vector<1x128xbf16>, vector<128x128xbf16>, vector<1x128xf32> -> vector<1x128xf32>
    %c0_107 = arith.constant 0 : index
    %c0_108 = arith.constant 0 : index
    %427 = vector.load %arg13[%c0_107, %c0_108] : memref<1x128xf32, #tpu.memory_space<vmem>>, vector<1x128xf32>
    %428 = arith.addf %426, %427 : vector<1x128xf32>
    %c0_109 = arith.constant 0 : index
    %c0_110 = arith.constant 0 : index
    %429 = vector.load %arg14[%c0_109, %c0_110] : memref<1x128xf32, #tpu.memory_space<vmem>>, vector<1x128xf32>
    tpu.vector_store %arg14[%c0_109, %c0_110], %428 {strides = array<i32>} : memref<1x128xf32, #tpu.memory_space<vmem>>, vector<1x128xf32>,
    return
  }
}

</mosaic_0001>

<llo_original>
// kernel: tpu_custom_call.1
$region0: #{tpu_custom_call.1}
  #allocation0 [shape = 'u32[]', space=smem, size = 0x4, offset = 0x4, fixed_abs, tag = 'smem constant byte address 0x4 - core index']
  #allocation1 [shape = 'u32[144,128]{1,0:T(1,128)}', space=vmem, size = 0x12000, scoped, tag = 'internal scratch']
  #allocation2 [shape = 'f32[8,128]{1,0:T(8,128)}', space=vmem, size = 0x1000, scoped, tag = 'scratch operand']
  #allocation3 [shape = 'f32[8,32]{1,0:T(8,128)}', space=vmem, size = 0x1000, scoped, tag = 'scratch operand']
  %s0 = inlined_call_operand.vmem [shape: f32[8,2], index: 0, kind: input, shape index: {}]
  %s1 = inlined_call_operand.vmem [shape: f32[2,128], index: 1, kind: input, shape index: {}]
  %s2 = inlined_call_operand.vmem [shape: f32[1,128], index: 2, kind: input, shape index: {}]
  %s3 = inlined_call_operand.vmem [shape: f32[1,128], index: 3, kind: input, shape index: {}]
  %s4 = inlined_call_operand.vmem [shape: f32[1,128], index: 4, kind: input, shape index: {}]
  %s5 = inlined_call_operand.hbm [shape: bf16[32,256], index: 5, kind: input, shape index: {}]
  %s6 = inlined_call_operand.vmem [shape: bf16[32,128], index: 6, kind: input, shape index: {}]
  %s7 = inlined_call_operand.vmem [shape: f32[1,128], index: 7, kind: input, shape index: {}]
  %s8 = inlined_call_operand.hbm [shape: bf16[8,32,128], index: 8, kind: input, shape index: {}]
  %s9 = inlined_call_operand.vmem [shape: f32[1,128], index: 9, kind: input, shape index: {}]
  %s10 = inlined_call_operand.hbm [shape: bf16[128,128], index: 10, kind: input, shape index: {}]
  %s11 = inlined_call_operand.vmem [shape: f32[1,128], index: 11, kind: input, shape index: {}]
  %s12 = inlined_call_operand.hbm [shape: bf16[128,128], index: 12, kind: input, shape index: {}]
  %s13 = inlined_call_operand.vmem [shape: f32[1,128], index: 13, kind: input, shape index: {}]
  %s14 = inlined_call_operand.hbm [shape: f32[1,128], index: 14, kind: output, shape index: {}]
  %s15 = sld [smem:[#allocation0]]
  $region82: #{tpu_custom_call.1} parent=0
    _
  %s17 = ssub.s32 1, %s15
  %s18 = scalar_select 0, %s17, %s15
  $region1: #{tpu_custom_call.1} parent=0
    #allocation4 [shape = 'u8[16384]{0}', space=vmem, size = 0x4000, scoped, tag = 'input window, operand 5, single buffered']
    #allocation5 [shape = 's32[1]{0}', space=sflag, size = 0x4, scoped, tag = 'scoped memory for tpu_custom_call.1']
    #allocation6 [shape = 's32[1]{0}', space=sflag, size = 0x4, scoped, tag = 'scoped memory for tpu_custom_call.1']
    #allocation7 [shape = 'u8[65536]{0}', space=vmem, size = 0x10000, scoped, tag = 'input window, operand 8, single buffered']
    #allocation8 [shape = 's32[1]{0}', space=sflag, size = 0x4, scoped, tag = 'scoped memory for tpu_custom_call.1']
    #allocation9 [shape = 'u8[32768]{0}', space=vmem, size = 0x8000, scoped, tag = 'input window, operand 10, single buffered']
    #allocation10 [shape = 'u8[32768]{0}', space=vmem, size = 0x8000, scoped, tag = 'input window, operand 12, single buffered']
    #allocation11 [shape = 's32[1]{0}', space=sflag, size = 0x4, scoped, tag = 'scoped memory for tpu_custom_call.1']
    #allocation12 [shape = 'u8[512]{0}', space=vmem, size = 0x400, scoped, tag = 'output window, operand 0, single buffered']
    %19 = vsyncpa [#allocation5], 0
    %20 = vsyncpa [#allocation8], 0
    %21 = vsyncpa [#allocation11], 0
    %22 = vsyncpa [#allocation6], 0
    // Predicated region
    $region2: #{tpu_custom_call.1} parent=1 // pred_check
      _
    $region3: #{tpu_custom_call.1} parent=1 // pred_check_branch
      %24 = sbr.rel (0) target = $region5
    $region4: #{tpu_custom_call.1} parent=1 // pred_region
      _
    $region5: #{tpu_custom_call.1} parent=1 // pred_fallthru
      _
    // Predicated region
    $region6: #{tpu_custom_call.1} parent=1 // pred_check
      _
    $region7: #{tpu_custom_call.1} parent=1 // pred_check_branch
      %26 = sbr.rel (0) target = $region9
    $region8: #{tpu_custom_call.1} parent=1 // pred_region
      _
    $region9: #{tpu_custom_call.1} parent=1 // pred_fallthru
      _
    // Predicated region
    $region10: #{tpu_custom_call.1} parent=1 // pred_check
      _
    $region11: #{tpu_custom_call.1} parent=1 // pred_check_branch
      %28 = sbr.rel (0) target = $region13
    $region12: #{tpu_custom_call.1} parent=1 // pred_region
      _
    $region13: #{tpu_custom_call.1} parent=1 // pred_fallthru
      _
    // Predicated region
    $region14: #{tpu_custom_call.1} parent=1 // pred_check
      _
    $region15: #{tpu_custom_call.1} parent=1 // pred_check_branch
      %30 = sbr.rel (0) target = $region17
    $region16: #{tpu_custom_call.1} parent=1 // pred_region
      _
    $region17: #{tpu_custom_call.1} parent=1 // pred_fallthru
      _
    // Predicated region
    $region18: #{tpu_custom_call.1} parent=1 // pred_check
      _
    $region19: #{tpu_custom_call.1} parent=1 // pred_check_branch
      %32 = sbr.rel (0) target = $region21
    $region20: #{tpu_custom_call.1} parent=1 // pred_region
      _
    $region21: #{tpu_custom_call.1} parent=1 // pred_fallthru
      _
    // Predicated region
    $region22: #{tpu_custom_call.1} parent=1 // pred_check
      _
    $region23: #{tpu_custom_call.1} parent=1 // pred_check_branch
      %34 = sbr.rel (0) target = $region25
    $region24: #{tpu_custom_call.1} parent=1 // pred_region
      %s36 = ssub.s32 512, 512
      %37 = vsyncadd [#allocation5], %s36
      %s38 = sshll.u32 [#allocation4], 4
      %s39 = int_to_ptr.vmem [resolvable:$true] %s38
      %44 = dma.hbm_to_vmem [thread:$0]  %s5, 512, %s39, [#allocation5], 128, 128, 8
    $region25: #{tpu_custom_call.1} parent=1 // pred_fallthru
      _
    // Predicated region
    $region26: #{tpu_custom_call.1} parent=1 // pred_check
      _
    $region27: #{tpu_custom_call.1} parent=1 // pred_check_branch
      %46 = sbr.rel (0) target = $region29
    $region28: #{tpu_custom_call.1} parent=1 // pred_region
      _
    $region29: #{tpu_custom_call.1} parent=1 // pred_fallthru
      _
    // Predicated region
    $region30: #{tpu_custom_call.1} parent=1 // pred_check
      _
    $region31: #{tpu_custom_call.1} parent=1 // pred_check_branch
      %48 = sbr.rel (0) target = $region33
    $region32: #{tpu_custom_call.1} parent=1 // pred_region
      _
    $region33: #{tpu_custom_call.1} parent=1 // pred_fallthru
      _
    // Predicated region
    $region34: #{tpu_custom_call.1} parent=1 // pred_check
      _
    $region35: #{tpu_custom_call.1} parent=1 // pred_check_branch
      %50 = sbr.rel (0) target = $region37
    $region36: #{tpu_custom_call.1} parent=1 // pred_region
      %s52 = ssub.s32 2048, 2048
      %53 = vsyncadd [#allocation8], %s52
      %s54 = sshll.u32 [#allocation7], 4
      %s55 = int_to_ptr.vmem [resolvable:$true] %s54
      %60 = dma.hbm_to_vmem [thread:$0]  %s8, 2048, %s55, [#allocation8], 64, 64, 4
    $region37: #{tpu_custom_call.1} parent=1 // pred_fallthru
      _
    // Predicated region
    $region38: #{tpu_custom_call.1} parent=1 // pred_check
      _
    $region39: #{tpu_custom_call.1} parent=1 // pred_check_branch
      %62 = sbr.rel (0) target = $region41
    $region40: #{tpu_custom_call.1} parent=1 // pred_region
      _
    $region41: #{tpu_custom_call.1} parent=1 // pred_fallthru
      _
    // Predicated region
    $region42: #{tpu_custom_call.1} parent=1 // pred_check
      _
    $region43: #{tpu_custom_call.1} parent=1 // pred_check_branch
      %64 = sbr.rel (0) target = $region45
    $region44: #{tpu_custom_call.1} parent=1 // pred_region
      %s66 = ssub.s32 1024, 1024
      %67 = vsyncadd [#allocation8], %s66
      %s68 = sshll.u32 [#allocation9], 4
      %s69 = int_to_ptr.vmem [resolvable:$true] %s68
      %74 = dma.hbm_to_vmem [thread:$0]  %s10, 1024, %s69, [#allocation8], 64, 64, 4
    $region45: #{tpu_custom_call.1} parent=1 // pred_fallthru
      _
    // Predicated region
    $region46: #{tpu_custom_call.1} parent=1 // pred_check
      _
    $region47: #{tpu_custom_call.1} parent=1 // pred_check_branch
      %76 = sbr.rel (0) target = $region49
    $region48: #{tpu_custom_call.1} parent=1 // pred_region
      _
    $region49: #{tpu_custom_call.1} parent=1 // pred_fallthru
      _
    // Predicated region
    $region50: #{tpu_custom_call.1} parent=1 // pred_check
      _
    $region51: #{tpu_custom_call.1} parent=1 // pred_check_branch
      %78 = sbr.rel (0) target = $region53
    $region52: #{tpu_custom_call.1} parent=1 // pred_region
      %s80 = ssub.s32 1024, 1024
      %81 = vsyncadd [#allocation11], %s80
      %s82 = sshll.u32 [#allocation10], 4
      %s83 = int_to_ptr.vmem [resolvable:$true] %s82
      %88 = dma.hbm_to_vmem [thread:$0]  %s12, 1024, %s83, [#allocation11], 64, 64, 4
    $region53: #{tpu_custom_call.1} parent=1 // pred_fallthru
      _
    // Predicated region
    $region54: #{tpu_custom_call.1} parent=1 // pred_check
      _
    $region55: #{tpu_custom_call.1} parent=1 // pred_check_branch
      %90 = sbr.rel (0) target = $region57
    $region56: #{tpu_custom_call.1} parent=1 // pred_region
      _
    $region57: #{tpu_custom_call.1} parent=1 // pred_fallthru
      _
    // Predicated region
    $region58: #{tpu_custom_call.1} parent=1 // pred_check
      _
    $region59: #{tpu_custom_call.1} parent=1 // pred_check_branch
      %92 = sbr.rel (0) target = $region61
    $region60: #{tpu_custom_call.1} parent=1 // pred_region
      %93 = dma.done [#allocation5], 512
    $region61: #{tpu_custom_call.1} parent=1 // pred_fallthru
      _
    // Predicated region
    $region62: #{tpu_custom_call.1} parent=1 // pred_check
      _
    $region63: #{tpu_custom_call.1} parent=1 // pred_check_branch
      %95 = sbr.rel (0) target = $region65
    $region64: #{tpu_custom_call.1} parent=1 // pred_region
      %96 = dma.done [#allocation8], 2048
    $region65: #{tpu_custom_call.1} parent=1 // pred_fallthru
      _
    // Predicated region
    $region66: #{tpu_custom_call.1} parent=1 // pred_check
      _
    $region67: #{tpu_custom_call.1} parent=1 // pred_check_branch
      %98 = sbr.rel (0) target = $region69
    $region68: #{tpu_custom_call.1} parent=1 // pred_region
      %99 = dma.done [#allocation8], 1024
    $region69: #{tpu_custom_call.1} parent=1 // pred_fallthru
      _
    // Predicated region
    $region70: #{tpu_custom_call.1} parent=1 // pred_check
      _
    $region71: #{tpu_custom_call.1} parent=1 // pred_check_branch
      %101 = sbr.rel (0) target = $region73
    $region72: #{tpu_custom_call.1} parent=1 // pred_region
      %102 = dma.done [#allocation11], 1024
    $region73: #{tpu_custom_call.1} parent=1 // pred_fallthru
      _
    %v104 = vld [vmem:[%s3] sm:$0x1]
    %v105 = vld [vmem:[%s4] sm:$0x1]
    %v106 = vld [vmem:[%s7] sm:$0x1]
    %v107 = vld [vmem:[#allocation4] sm:$0xff]
    %v108 = vld [vmem:[#allocation4 + $0x8] sm:$0xff]
    %v109 = vld [vmem:[#allocation4 + $0x10] sm:$0xff]
    %v110 = vld [vmem:[#allocation4 + $0x18] sm:$0xff]
    %v111 = vld [vmem:[%s6] sm:$0xf]
    %v112 = vld [vmem:[%s6 + $0x4] sm:$0xf]
    %v113 = vld [vmem:[%s6 + $0x8] sm:$0xf]
    %v114 = vld [vmem:[%s6 + $0xc] sm:$0xf]
    %v115 = vld [vmem:[%s0] sm:$0xff]
    %v116 = vld [vmem:[%s1] sm:$0x3]
    %118 = vset.pattern.permute.xlu0 0
    %119 = vperm.xlu0 %118, %v115
    %v120 = vpop.permute.xlu0 %119
    %v122 = vlaneseq
    %v123 = vshrl.u32 %v122, 7
    %v124 = vsub.s32 0, %v123
    %v125 = vrot.slane %v116, %v124
    %v126 = vmul.f32 %v120, %v125
    %127 = vset.pattern.permute.xlu0 1
    %128 = vperm.xlu0 %127, %v115
    %v129 = vpop.permute.xlu0 %128
    %v131 = vlaneseq
    %v132 = vshrl.u32 %v131, 7
    %v133 = vsub.s32 1, %v132
    %v134 = vrot.slane %v116, %v133
    %v135 = vmul.f32 %v129, %v134
    %v136 = vadd.f32 %v126, %v135
    %v137 = vld [vmem:[%s2] sm:$0x1]
    %v139 = vlaneseq
    %v140 = vshrl.u32 %v139, 7
    %v141 = vsub.s32 0, %v140
    %v142 = vrot.slane %v137, %v141
    %v144 = vadd.f32 %v136, %v142
    %145 = vst [vmem:[#allocation2] sm:$0xff] %v144
    %v146 = vld [vmem:[#allocation2] sm:$0x1]
    %v147 = vadd.f32 %v146, 0.0
    %v148 = vmul.f32 %v147, %v104
    %v149 = vtanh.pop %v148
    %v150 = vmul.f32 %v149, %v104
    %v151 = vadd.f32 %v150, %v105
    %v152 = vmul.f32 %v151, 0.0
    %154 = vrot.lane.b32.xlu0 %v151, 64
    %v155 = vpop.permute.xlu0 %154
    %v157 = vmul.f32 %v151, %v155
    %159 = vrot.lane.b32.xlu0 %v157, 32
    %v160 = vpop.permute.xlu0 %159
    %v162 = vadd.f32 %v152, %v160
    %v163 = vtanh.pop %v162
    %165 = vrot.lane.b32.xlu0 %v163, 64
    %v166 = vpop.permute.xlu0 %165
    %v168 = vmul.f32 %v151, %v166
    %v169 = vpack.c.bf16 %v168, %v168
    %171 = vrot.lane.b32.xlu0 %v169, 32
    %v172 = vpop.permute.xlu0 %171
    %v177 = vunpack.c.l.b16 %v107
    %v178 = vunpack.c.h.b16 %v107
    %v179 = vunpack.c.l.b16 %v108
    %v180 = vunpack.c.h.b16 %v108
    %v181 = vunpack.c.l.b16 %v109
    %v182 = vunpack.c.h.b16 %v109
    %v183 = vunpack.c.l.b16 %v110
    %v184 = vunpack.c.h.b16 %v110
    %v185 = vpack.c.b16 %v179, %v177
    %v186 = vpack.c.b16 %v180, %v178
    %v187 = vpack.c.b16 %v183, %v181
    %v188 = vpack.c.b16 %v184, %v182
    %vm193 = vcmask 261120
    %v195 = vsel %vm193, %v172, 0
    %197 = vmatprep.subr.bf16.mxu0 %v186
    %198 = vmatpush1.bf16.msra.mxu0 %v185
    %199 = vmatprep.subr.bf16.mxu0 %v188
    %200 = vmatpush1.bf16.msra.mxu0 %v187
    %201 = vmatprep.subr.bf16.mxu0 0
    %202 = vmatpush1.bf16.msra.mxu0 0
    %203 = vmatprep.subr.bf16.mxu0 0
    %204 = vmatpush1.bf16.msra.mxu0 0
    %205 = vmatprep.subr.bf16.mxu0 0
    %206 = vmatpush1.bf16.msra.mxu0 0
    %207 = vmatprep.subr.bf16.mxu0 0
    %208 = vmatpush1.bf16.msra.mxu0 0
    %209 = vmatprep.subr.bf16.mxu0 0
    %210 = vmatpush1.bf16.msra.mxu0 0
    %211 = vmatprep.subr.bf16.mxu0 0
    %212 = vmatpush1.bf16.msra.mxu0 0
    %213 = vmatprep.subr.bf16.mxu0 0
    %214 = vmatpush1.bf16.msra.mxu0 0
    %215 = vmatprep.subr.bf16.mxu0 0
    %216 = vmatpush1.bf16.msra.mxu0 0
    %217 = vmatprep.subr.bf16.mxu0 0
    %218 = vmatpush1.bf16.msra.mxu0 0
    %219 = vmatprep.subr.bf16.mxu0 0
    %220 = vmatpush1.bf16.msra.mxu0 0
    %221 = vmatprep.subr.bf16.mxu0 0
    %222 = vmatpush1.bf16.msra.mxu0 0
    %223 = vmatprep.subr.bf16.mxu0 0
    %224 = vmatpush1.bf16.msra.mxu0 0
    %225 = vmatprep.subr.bf16.mxu0 0
    %226 = vmatpush1.bf16.msra.mxu0 0
    %227 = vmatprep.subr.bf16.mxu0 0
    %228 = vmatpush1.bf16.msra.mxu0 0
    %229 = vmatprep.mubr.bf16.mxu0 0
    %230 = vmatmul.mubr.bf16.gmra.mrb[0].mxu0 %v195
    %v231 = vpop.f32.mrb[0].mxu0
    %v232 = vadd.f32 0.0, %v231
    %v233 = vpop.f32.mrb[0].mxu0
    %v234 = vadd.f32 0.0, %v233
    %v235 = vpop.f32.mrb[0].mxu0
    %v236 = vpop.f32.mrb[0].mxu0
    %237 = vdwg.mxu0
    %v238 = vadd.f32 %v234, %v106
    %v239 = vmul.f32 %v238, %v104
    %v240 = vtanh.pop %v239
    %v241 = vmul.f32 %v240, %v104
    %v242 = vadd.f32 %v241, %v105
    %v243 = vmul.f32 %v242, 0.0
    %245 = vrot.lane.b32.xlu0 %v242, 64
    %v246 = vpop.permute.xlu0 %245
    %v248 = vmul.f32 %v242, %v246
    %250 = vrot.lane.b32.xlu0 %v248, 32
    %v251 = vpop.permute.xlu0 %250
    %v253 = vadd.f32 %v243, %v251
    %v254 = vtanh.pop %v253
    %256 = vrot.lane.b32.xlu0 %v254, 64
    %v257 = vpop.permute.xlu0 %256
    %v259 = vmul.f32 %v242, %v257
    %v260 = vpack.c.bf16 %v259, %v259
    %262 = vrot.lane.b32.xlu0 %v260, 32
    %v263 = vpop.permute.xlu0 %262
    %v268 = vunpack.c.l.b16 %v111
    %v269 = vunpack.c.l.b16 %v112
    %v270 = vunpack.c.l.b16 %v113
    %v271 = vunpack.c.l.b16 %v114
    %v272 = vpack.c.b16 %v269, %v268
    %v273 = vpack.c.b16 %v271, %v270
    %v277 = vsel %vm193, %v263, 0
    %279 = vmatprep.subr.bf16.mxu0 0
    %280 = vmatpush1.bf16.msra.mxu0 %v272
    %281 = vmatprep.subr.bf16.mxu0 0
    %282 = vmatpush1.bf16.msra.mxu0 %v273
    %283 = vmatprep.subr.bf16.mxu0 0
    %284 = vmatpush1.bf16.msra.mxu0 0
    %285 = vmatprep.subr.bf16.mxu0 0
    %286 = vmatpush1.bf16.msra.mxu0 0
    %287 = vmatprep.subr.bf16.mxu0 0
    %288 = vmatpush1.bf16.msra.mxu0 0
    %289 = vmatprep.subr.bf16.mxu0 0
    %290 = vmatpush1.bf16.msra.mxu0 0
    %291 = vmatprep.subr.bf16.mxu0 0
    %292 = vmatpush1.bf16.msra.mxu0 0
    %293 = vmatprep.subr.bf16.mxu0 0
    %294 = vmatpush1.bf16.msra.mxu0 0
    %295 = vmatprep.subr.bf16.mxu0 0
    %296 = vmatpush1.bf16.msra.mxu0 0
    %297 = vmatprep.subr.bf16.mxu0 0
    %298 = vmatpush1.bf16.msra.mxu0 0
    %299 = vmatprep.subr.bf16.mxu0 0
    %300 = vmatpush1.bf16.msra.mxu0 0
    %301 = vmatprep.subr.bf16.mxu0 0
    %302 = vmatpush1.bf16.msra.mxu0 0
    %303 = vmatprep.subr.bf16.mxu0 0
    %304 = vmatpush1.bf16.msra.mxu0 0
    %305 = vmatprep.subr.bf16.mxu0 0
    %306 = vmatpush1.bf16.msra.mxu0 0
    %307 = vmatprep.subr.bf16.mxu0 0
    %308 = vmatpush1.bf16.msra.mxu0 0
    %309 = vmatprep.subr.bf16.mxu0 0
    %310 = vmatpush1.bf16.msra.mxu0 0
    %311 = vmatprep.mubr.bf16.mxu0 0
    %312 = vmatmul.mubr.bf16.gmra.mrb[0].mxu0 %v277
    %v313 = vpop.f32.mrb[0].mxu0
    %v314 = vadd.f32 %v106, %v313
    %v315 = vpop.f32.mrb[0].mxu0
    %v316 = vpop.f32.mrb[0].mxu0
    %v317 = vpop.f32.mrb[0].mxu0
    %318 = vdwg.mxu0
    %320 = vrot.lane.b32.xlu0 %v259, 32
    %v321 = vpop.permute.xlu0 %320
    %vm323 = vcmask 253952
    %324 = vst.msk [vmem:[#allocation3] sm:$0x1] %vm323, %v321
    %v325 = vld [vmem:[#allocation2 + $0x1] sm:$0x1]
    %v326 = vadd.f32 %v325, %v232
    %v327 = vmul.f32 %v326, %v104
    %v328 = vtanh.pop %v327
    %v329 = vmul.f32 %v328, %v104
    %v330 = vadd.f32 %v329, %v105
    %v331 = vmul.f32 %v330, %v162
    %333 = vrot.lane.b32.xlu0 %v330, 64
    %v334 = vpop.permute.xlu0 %333
    %v336 = vmul.f32 %v330, %v334
    %338 = vrot.lane.b32.xlu0 %v336, 32
    %v339 = vpop.permute.xlu0 %338
    %v341 = vadd.f32 %v331, %v339
    %v342 = vtanh.pop %v341
    %344 = vrot.lane.b32.xlu0 %v342, 64
    %v345 = vpop.permute.xlu0 %344
    %v347 = vmul.f32 %v330, %v345
    %v348 = vpack.c.bf16 %v347, %v347
    %350 = vrot.lane.b32.xlu0 %v348, 32
    %v351 = vpop.permute.xlu0 %350
    %v353 = vsel %vm193, %v351, 0
    %355 = vmatprep.subr.bf16.mxu0 %v186
    %356 = vmatpush1.bf16.msra.mxu0 %v185
    %357 = vmatprep.subr.bf16.mxu0 %v188
    %358 = vmatpush1.bf16.msra.mxu0 %v187
    %359 = vmatprep.subr.bf16.mxu0 0
    %360 = vmatpush1.bf16.msra.mxu0 0
    %361 = vmatprep.subr.bf16.mxu0 0
    %362 = vmatpush1.bf16.msra.mxu0 0
    %363 = vmatprep.subr.bf16.mxu0 0
    %364 = vmatpush1.bf16.msra.mxu0 0
    %365 = vmatprep.subr.bf16.mxu0 0
    %366 = vmatpush1.bf16.msra.mxu0 0
    %367 = vmatprep.subr.bf16.mxu0 0
    %368 = vmatpush1.bf16.msra.mxu0 0
    %369 = vmatprep.subr.bf16.mxu0 0
    %370 = vmatpush1.bf16.msra.mxu0 0
    %371 = vmatprep.subr.bf16.mxu0 0
    %372 = vmatpush1.bf16.msra.mxu0 0
    %373 = vmatprep.subr.bf16.mxu0 0
    %374 = vmatpush1.bf16.msra.mxu0 0
    %375 = vmatprep.subr.bf16.mxu0 0
    %376 = vmatpush1.bf16.msra.mxu0 0
    %377 = vmatprep.subr.bf16.mxu0 0
    %378 = vmatpush1.bf16.msra.mxu0 0
    %379 = vmatprep.subr.bf16.mxu0 0
    %380 = vmatpush1.bf16.msra.mxu0 0
    %381 = vmatprep.subr.bf16.mxu0 0
    %382 = vmatpush1.bf16.msra.mxu0 0
    %383 = vmatprep.subr.bf16.mxu0 0
    %384 = vmatpush1.bf16.msra.mxu0 0
    %385 = vmatprep.subr.bf16.mxu0 0
    %386 = vmatpush1.bf16.msra.mxu0 0
    %387 = vmatprep.mubr.bf16.mxu0 0
    %388 = vmatmul.mubr.bf16.gmra.mrb[0].mxu0 %v353
    %v389 = vpop.f32.mrb[0].mxu0
    %v390 = vadd.f32 0.0, %v389
    %v391 = vpop.f32.mrb[0].mxu0
    %v392 = vadd.f32 0.0, %v391
    %v393 = vpop.f32.mrb[0].mxu0
    %v394 = vpop.f32.mrb[0].mxu0
    %395 = vdwg.mxu0
    %v396 = vadd.f32 %v392, %v314
    %v397 = vmul.f32 %v396, %v104
    %v398 = vtanh.pop %v397
    %v399 = vmul.f32 %v398, %v104
    %v400 = vadd.f32 %v399, %v105
    %v401 = vmul.f32 %v400, %v253
    %403 = vrot.lane.b32.xlu0 %v400, 64
    %v404 = vpop.permute.xlu0 %403
    %v406 = vmul.f32 %v400, %v404
    %408 = vrot.lane.b32.xlu0 %v406, 32
    %v409 = vpop.permute.xlu0 %408
    %v411 = vadd.f32 %v401, %v409
    %v412 = vtanh.pop %v411
    %414 = vrot.lane.b32.xlu0 %v412, 64
    %v415 = vpop.permute.xlu0 %414
    %v417 = vmul.f32 %v400, %v415
    %v418 = vpack.c.bf16 %v417, %v417
    %420 = vrot.lane.b32.xlu0 %v418, 32
    %v421 = vpop.permute.xlu0 %420
    %v423 = vsel %vm193, %v421, 0
    %425 = vmatprep.subr.bf16.mxu0 0
    %426 = vmatpush1.bf16.msra.mxu0 %v272
    %427 = vmatprep.subr.bf16.mxu0 0
    %428 = vmatpush1.bf16.msra.mxu0 %v273
    %429 = vmatprep.subr.bf16.mxu0 0
    %430 = vmatpush1.bf16.msra.mxu0 0
    %431 = vmatprep.subr.bf16.mxu0 0
    %432 = vmatpush1.bf16.msra.mxu0 0
    %433 = vmatprep.subr.bf16.mxu0 0
    %434 = vmatpush1.bf16.msra.mxu0 0
    %435 = vmatprep.subr.bf16.mxu0 0
    %436 = vmatpush1.bf16.msra.mxu0 0
    %437 = vmatprep.subr.bf16.mxu0 0
    %438 = vmatpush1.bf16.msra.mxu0 0
    %439 = vmatprep.subr.bf16.mxu0 0
    %440 = vmatpush1.bf16.msra.mxu0 0
    %441 = vmatprep.subr.bf16.mxu0 0
    %442 = vmatpush1.bf16.msra.mxu0 0
    %443 = vmatprep.subr.bf16.mxu0 0
    %444 = vmatpush1.bf16.msra.mxu0 0
    %445 = vmatprep.subr.bf16.mxu0 0
    %446 = vmatpush1.bf16.msra.mxu0 0
    %447 = vmatprep.subr.bf16.mxu0 0
    %448 = vmatpush1.bf16.msra.mxu0 0
    %449 = vmatprep.subr.bf16.mxu0 0
    %450 = vmatpush1.bf16.msra.mxu0 0
    %451 = vmatprep.subr.bf16.mxu0 0
    %452 = vmatpush1.bf16.msra.mxu0 0
    %453 = vmatprep.subr.bf16.mxu0 0
    %454 = vmatpush1.bf16.msra.mxu0 0
    %455 = vmatprep.subr.bf16.mxu0 0
    %456 = vmatpush1.bf16.msra.mxu0 0
    %457 = vmatprep.mubr.bf16.mxu0 0
    %458 = vmatmul.mubr.bf16.gmra.mrb[0].mxu0 %v423
    %v459 = vpop.f32.mrb[0].mxu0
    %v460 = vadd.f32 %v106, %v459
    %v461 = vpop.f32.mrb[0].mxu0
    %v462 = vpop.f32.mrb[0].mxu0
    %v463 = vpop.f32.mrb[0].mxu0
    %464 = vdwg.mxu0
    %466 = vrot.lane.b32.xlu0 %v417, 32
    %v467 = vpop.permute.xlu0 %466
    %469 = vst.msk [vmem:[#allocation3 + $0x1] sm:$0x1] %vm323, %v467
    %v470 = vld [vmem:[#allocation2 + $0x2] sm:$0x1]
    %v471 = vadd.f32 %v470, %v390
    %v472 = vmul.f32 %v471, %v104
    %v473 = vtanh.pop %v472
    %v474 = vmul.f32 %v473, %v104
    %v475 = vadd.f32 %v474, %v105
    %v476 = vmul.f32 %v475, %v341
    %478 = vrot.lane.b32.xlu0 %v475, 64
    %v479 = vpop.permute.xlu0 %478
    %v481 = vmul.f32 %v475, %v479
    %483 = vrot.lane.b32.xlu0 %v481, 32
    %v484 = vpop.permute.xlu0 %483
    %v486 = vadd.f32 %v476, %v484
    %v487 = vtanh.pop %v486
    %489 = vrot.lane.b32.xlu0 %v487, 64
    %v490 = vpop.permute.xlu0 %489
    %v492 = vmul.f32 %v475, %v490
    %v493 = vpack.c.bf16 %v492, %v492
    %495 = vrot.lane.b32.xlu0 %v493, 32
    %v496 = vpop.permute.xlu0 %495
    %v498 = vsel %vm193, %v496, 0
    %500 = vmatprep.subr.bf16.mxu0 %v186
    %501 = vmatpush1.bf16.msra.mxu0 %v185
    %502 = vmatprep.subr.bf16.mxu0 %v188
    %503 = vmatpush1.bf16.msra.mxu0 %v187
    %504 = vmatprep.subr.bf16.mxu0 0
    %505 = vmatpush1.bf16.msra.mxu0 0
    %506 = vmatprep.subr.bf16.mxu0 0
    %507 = vmatpush1.bf16.msra.mxu0 0
    %508 = vmatprep.subr.bf16.mxu0 0
    %509 = vmatpush1.bf16.msra.mxu0 0
    %510 = vmatprep.subr.bf16.mxu0 0
    %511 = vmatpush1.bf16.msra.mxu0 0
    %512 = vmatprep.subr.bf16.mxu0 0
    %513 = vmatpush1.bf16.msra.mxu0 0
    %514 = vmatprep.subr.bf16.mxu0 0
    %515 = vmatpush1.bf16.msra.mxu0 0
    %516 = vmatprep.subr.bf16.mxu0 0
    %517 = vmatpush1.bf16.msra.mxu0 0
    %518 = vmatprep.subr.bf16.mxu0 0
    %519 = vmatpush1.bf16.msra.mxu0 0
    %520 = vmatprep.subr.bf16.mxu0 0
    %521 = vmatpush1.bf16.msra.mxu0 0
    %522 = vmatprep.subr.bf16.mxu0 0
    %523 = vmatpush1.bf16.msra.mxu0 0
    %524 = vmatprep.subr.bf16.mxu0 0
    %525 = vmatpush1.bf16.msra.mxu0 0
    %526 = vmatprep.subr.bf16.mxu0 0
    %527 = vmatpush1.bf16.msra.mxu0 0
    %528 = vmatprep.subr.bf16.mxu0 0
    %529 = vmatpush1.bf16.msra.mxu0 0
    %530 = vmatprep.subr.bf16.mxu0 0
    %531 = vmatpush1.bf16.msra.mxu0 0
    %532 = vmatprep.mubr.bf16.mxu0 0
    %533 = vmatmul.mubr.bf16.gmra.mrb[0].mxu0 %v498
    %v534 = vpop.f32.mrb[0].mxu0
    %v535 = vadd.f32 0.0, %v534
    %v536 = vpop.f32.mrb[0].mxu0
    %v537 = vadd.f32 0.0, %v536
    %v538 = vpop.f32.mrb[0].mxu0
    %v539 = vpop.f32.mrb[0].mxu0
    %540 = vdwg.mxu0
    %v541 = vadd.f32 %v537, %v460
    %v542 = vmul.f32 %v541, %v104
    %v543 = vtanh.pop %v542
    %v544 = vmul.f32 %v543, %v104
    %v545 = vadd.f32 %v544, %v105
    %v546 = vmul.f32 %v545, %v411
    %548 = vrot.lane.b32.xlu0 %v545, 64
    %v549 = vpop.permute.xlu0 %548
    %v551 = vmul.f32 %v545, %v549
    %553 = vrot.lane.b32.xlu0 %v551, 32
    %v554 = vpop.permute.xlu0 %553
    %v556 = vadd.f32 %v546, %v554
    %v557 = vtanh.pop %v556
    %559 = vrot.lane.b32.xlu0 %v557, 64
    %v560 = vpop.permute.xlu0 %559
    %v562 = vmul.f32 %v545, %v560
    %v563 = vpack.c.bf16 %v562, %v562
    %565 = vrot.lane.b32.xlu0 %v563, 32
    %v566 = vpop.permute.xlu0 %565
    %v568 = vsel %vm193, %v566, 0
    %570 = vmatprep.subr.bf16.mxu0 0
    %571 = vmatpush1.bf16.msra.mxu0 %v272
    %572 = vmatprep.subr.bf16.mxu0 0
    %573 = vmatpush1.bf16.msra.mxu0 %v273
    %574 = vmatprep.subr.bf16.mxu0 0
    %575 = vmatpush1.bf16.msra.mxu0 0
    %576 = vmatprep.subr.bf16.mxu0 0
    %577 = vmatpush1.bf16.msra.mxu0 0
    %578 = vmatprep.subr.bf16.mxu0 0
    %579 = vmatpush1.bf16.msra.mxu0 0
    %580 = vmatprep.subr.bf16.mxu0 0
    %581 = vmatpush1.bf16.msra.mxu0 0
    %582 = vmatprep.subr.bf16.mxu0 0
    %583 = vmatpush1.bf16.msra.mxu0 0
    %584 = vmatprep.subr.bf16.mxu0 0
    %585 = vmatpush1.bf16.msra.mxu0 0
    %586 = vmatprep.subr.bf16.mxu0 0
    %587 = vmatpush1.bf16.msra.mxu0 0
    %588 = vmatprep.subr.bf16.mxu0 0
    %589 = vmatpush1.bf16.msra.mxu0 0
    %590 = vmatprep.subr.bf16.mxu0 0
    %591 = vmatpush1.bf16.msra.mxu0 0
    %592 = vmatprep.subr.bf16.mxu0 0
    %593 = vmatpush1.bf16.msra.mxu0 0
    %594 = vmatprep.subr.bf16.mxu0 0
    %595 = vmatpush1.bf16.msra.mxu0 0
    %596 = vmatprep.subr.bf16.mxu0 0
    %597 = vmatpush1.bf16.msra.mxu0 0
    %598 = vmatprep.subr.bf16.mxu0 0
    %599 = vmatpush1.bf16.msra.mxu0 0
    %600 = vmatprep.subr.bf16.mxu0 0
    %601 = vmatpush1.bf16.msra.mxu0 0
    %602 = vmatprep.mubr.bf16.mxu0 0
    %603 = vmatmul.mubr.bf16.gmra.mrb[0].mxu0 %v568
    %v604 = vpop.f32.mrb[0].mxu0
    %v605 = vadd.f32 %v106, %v604
    %v606 = vpop.f32.mrb[0].mxu0
    %v607 = vpop.f32.mrb[0].mxu0
    %v608 = vpop.f32.mrb[0].mxu0
    %609 = vdwg.mxu0
    %611 = vrot.lane.b32.xlu0 %v562, 32
    %v612 = vpop.permute.xlu0 %611
    %614 = vst.msk [vmem:[#allocation3 + $0x2] sm:$0x1] %vm323, %v612
    %v615 = vld [vmem:[#allocation2 + $0x3] sm:$0x1]
    %v616 = vadd.f32 %v615, %v535
    %v617 = vmul.f32 %v616, %v104
    %v618 = vtanh.pop %v617
    %v619 = vmul.f32 %v618, %v104
    %v620 = vadd.f32 %v619, %v105
    %v621 = vmul.f32 %v620, %v486
    %623 = vrot.lane.b32.xlu0 %v620, 64
    %v624 = vpop.permute.xlu0 %623
    %v626 = vmul.f32 %v620, %v624
    %628 = vrot.lane.b32.xlu0 %v626, 32
    %v629 = vpop.permute.xlu0 %628
    %v631 = vadd.f32 %v621, %v629
    %v632 = vtanh.pop %v631
    %634 = vrot.lane.b32.xlu0 %v632, 64
    %v635 = vpop.permute.xlu0 %634
    %v637 = vmul.f32 %v620, %v635
    %v638 = vpack.c.bf16 %v637, %v637
    %640 = vrot.lane.b32.xlu0 %v638, 32
    %v641 = vpop.permute.xlu0 %640
    %v643 = vsel %vm193, %v641, 0
    %645 = vmatprep.subr.bf16.mxu0 %v186
    %646 = vmatpush1.bf16.msra.mxu0 %v185
    %647 = vmatprep.subr.bf16.mxu0 %v188
    %648 = vmatpush1.bf16.msra.mxu0 %v187
    %649 = vmatprep.subr.bf16.mxu0 0
    %650 = vmatpush1.bf16.msra.mxu0 0
    %651 = vmatprep.subr.bf16.mxu0 0
    %652 = vmatpush1.bf16.msra.mxu0 0
    %653 = vmatprep.subr.bf16.mxu0 0
    %654 = vmatpush1.bf16.msra.mxu0 0
    %655 = vmatprep.subr.bf16.mxu0 0
    %656 = vmatpush1.bf16.msra.mxu0 0
    %657 = vmatprep.subr.bf16.mxu0 0
    %658 = vmatpush1.bf16.msra.mxu0 0
    %659 = vmatprep.subr.bf16.mxu0 0
    %660 = vmatpush1.bf16.msra.mxu0 0
    %661 = vmatprep.subr.bf16.mxu0 0
    %662 = vmatpush1.bf16.msra.mxu0 0
    %663 = vmatprep.subr.bf16.mxu0 0
    %664 = vmatpush1.bf16.msra.mxu0 0
    %665 = vmatprep.subr.bf16.mxu0 0
    %666 = vmatpush1.bf16.msra.mxu0 0
    %667 = vmatprep.subr.bf16.mxu0 0
    %668 = vmatpush1.bf16.msra.mxu0 0
    %669 = vmatprep.subr.bf16.mxu0 0
    %670 = vmatpush1.bf16.msra.mxu0 0
    %671 = vmatprep.subr.bf16.mxu0 0
    %672 = vmatpush1.bf16.msra.mxu0 0
    %673 = vmatprep.subr.bf16.mxu0 0
    %674 = vmatpush1.bf16.msra.mxu0 0
    %675 = vmatprep.subr.bf16.mxu0 0
    %676 = vmatpush1.bf16.msra.mxu0 0
    %677 = vmatprep.mubr.bf16.mxu0 0
    %678 = vmatmul.mubr.bf16.gmra.mrb[0].mxu0 %v643
    %v679 = vpop.f32.mrb[0].mxu0
    %v680 = vadd.f32 0.0, %v679
    %v681 = vpop.f32.mrb[0].mxu0
    %v682 = vadd.f32 0.0, %v681
    %v683 = vpop.f32.mrb[0].mxu0
    %v684 = vpop.f32.mrb[0].mxu0
    %685 = vdwg.mxu0
    %v686 = vadd.f32 %v682, %v605
    %v687 = vmul.f32 %v686, %v104
    %v688 = vtanh.pop %v687
    %v689 = vmul.f32 %v688, %v104
    %v690 = vadd.f32 %v689, %v105
    %v691 = vmul.f32 %v690, %v556
    %693 = vrot.lane.b32.xlu0 %v690, 64
    %v694 = vpop.permute.xlu0 %693
    %v696 = vmul.f32 %v690, %v694
    %698 = vrot.lane.b32.xlu0 %v696, 32
    %v699 = vpop.permute.xlu0 %698
    %v701 = vadd.f32 %v691, %v699
    %v702 = vtanh.pop %v701
    %704 = vrot.lane.b32.xlu0 %v702, 64
    %v705 = vpop.permute.xlu0 %704
    %v707 = vmul.f32 %v690, %v705
    %v708 = vpack.c.bf16 %v707, %v707
    %710 = vrot.lane.b32.xlu0 %v708, 32
    %v711 = vpop.permute.xlu0 %710
    %v713 = vsel %vm193, %v711, 0
    %715 = vmatprep.subr.bf16.mxu0 0
    %716 = vmatpush1.bf16.msra.mxu0 %v272
    %717 = vmatprep.subr.bf16.mxu0 0
    %718 = vmatpush1.bf16.msra.mxu0 %v273
    %719 = vmatprep.subr.bf16.mxu0 0
    %720 = vmatpush1.bf16.msra.mxu0 0
    %721 = vmatprep.subr.bf16.mxu0 0
    %722 = vmatpush1.bf16.msra.mxu0 0
    %723 = vmatprep.subr.bf16.mxu0 0
    %724 = vmatpush1.bf16.msra.mxu0 0
    %725 = vmatprep.subr.bf16.mxu0 0
    %726 = vmatpush1.bf16.msra.mxu0 0
    %727 = vmatprep.subr.bf16.mxu0 0
    %728 = vmatpush1.bf16.msra.mxu0 0
    %729 = vmatprep.subr.bf16.mxu0 0
    %730 = vmatpush1.bf16.msra.mxu0 0
    %731 = vmatprep.subr.bf16.mxu0 0
    %732 = vmatpush1.bf16.msra.mxu0 0
    %733 = vmatprep.subr.bf16.mxu0 0
    %734 = vmatpush1.bf16.msra.mxu0 0
    %735 = vmatprep.subr.bf16.mxu0 0
    %736 = vmatpush1.bf16.msra.mxu0 0
    %737 = vmatprep.subr.bf16.mxu0 0
    %738 = vmatpush1.bf16.msra.mxu0 0
    %739 = vmatprep.subr.bf16.mxu0 0
    %740 = vmatpush1.bf16.msra.mxu0 0
    %741 = vmatprep.subr.bf16.mxu0 0
    %742 = vmatpush1.bf16.msra.mxu0 0
    %743 = vmatprep.subr.bf16.mxu0 0
    %744 = vmatpush1.bf16.msra.mxu0 0
    %745 = vmatprep.subr.bf16.mxu0 0
    %746 = vmatpush1.bf16.msra.mxu0 0
    %747 = vmatprep.mubr.bf16.mxu0 0
    %748 = vmatmul.mubr.bf16.gmra.mrb[0].mxu0 %v713
    %v749 = vpop.f32.mrb[0].mxu0
    %v750 = vadd.f32 %v106, %v749
    %v751 = vpop.f32.mrb[0].mxu0
    %v752 = vpop.f32.mrb[0].mxu0
    %v753 = vpop.f32.mrb[0].mxu0
    %754 = vdwg.mxu0
    %756 = vrot.lane.b32.xlu0 %v707, 32
    %v757 = vpop.permute.xlu0 %756
    %759 = vst.msk [vmem:[#allocation3 + $0x3] sm:$0x1] %vm323, %v757
    %v760 = vld [vmem:[#allocation2 + $0x4] sm:$0x1]
    %v761 = vadd.f32 %v760, %v680
    %v762 = vmul.f32 %v761, %v104
    %v763 = vtanh.pop %v762
    %v764 = vmul.f32 %v763, %v104
    %v765 = vadd.f32 %v764, %v105
    %v766 = vmul.f32 %v765, %v631
    %768 = vrot.lane.b32.xlu0 %v765, 64
    %v769 = vpop.permute.xlu0 %768
    %v771 = vmul.f32 %v765, %v769
    %773 = vrot.lane.b32.xlu0 %v771, 32
    %v774 = vpop.permute.xlu0 %773
    %v776 = vadd.f32 %v766, %v774
    %v777 = vtanh.pop %v776
    %779 = vrot.lane.b32.xlu0 %v777, 64
    %v780 = vpop.permute.xlu0 %779
    %v782 = vmul.f32 %v765, %v780
    %v783 = vpack.c.bf16 %v782, %v782
    %785 = vrot.lane.b32.xlu0 %v783, 32
    %v786 = vpop.permute.xlu0 %785
    %v788 = vsel %vm193, %v786, 0
    %790 = vmatprep.subr.bf16.mxu0 %v186
    %791 = vmatpush1.bf16.msra.mxu0 %v185
    %792 = vmatprep.subr.bf16.mxu0 %v188
    %793 = vmatpush1.bf16.msra.mxu0 %v187
    %794 = vmatprep.subr.bf16.mxu0 0
    %795 = vmatpush1.bf16.msra.mxu0 0
    %796 = vmatprep.subr.bf16.mxu0 0
    %797 = vmatpush1.bf16.msra.mxu0 0
    %798 = vmatprep.subr.bf16.mxu0 0
    %799 = vmatpush1.bf16.msra.mxu0 0
    %800 = vmatprep.subr.bf16.mxu0 0
    %801 = vmatpush1.bf16.msra.mxu0 0
    %802 = vmatprep.subr.bf16.mxu0 0
    %803 = vmatpush1.bf16.msra.mxu0 0
    %804 = vmatprep.subr.bf16.mxu0 0
    %805 = vmatpush1.bf16.msra.mxu0 0
    %806 = vmatprep.subr.bf16.mxu0 0
    %807 = vmatpush1.bf16.msra.mxu0 0
    %808 = vmatprep.subr.bf16.mxu0 0
    %809 = vmatpush1.bf16.msra.mxu0 0
    %810 = vmatprep.subr.bf16.mxu0 0
    %811 = vmatpush1.bf16.msra.mxu0 0
    %812 = vmatprep.subr.bf16.mxu0 0
    %813 = vmatpush1.bf16.msra.mxu0 0
    %814 = vmatprep.subr.bf16.mxu0 0
    %815 = vmatpush1.bf16.msra.mxu0 0
    %816 = vmatprep.subr.bf16.mxu0 0
    %817 = vmatpush1.bf16.msra.mxu0 0
    %818 = vmatprep.subr.bf16.mxu0 0
    %819 = vmatpush1.bf16.msra.mxu0 0
    %820 = vmatprep.subr.bf16.mxu0 0
    %821 = vmatpush1.bf16.msra.mxu0 0
    %822 = vmatprep.mubr.bf16.mxu0 0
    %823 = vmatmul.mubr.bf16.gmra.mrb[0].mxu0 %v788
    %v824 = vpop.f32.mrb[0].mxu0
    %v825 = vadd.f32 0.0, %v824
    %v826 = vpop.f32.mrb[0].mxu0
    %v827 = vadd.f32 0.0, %v826
    %v828 = vpop.f32.mrb[0].mxu0
    %v829 = vpop.f32.mrb[0].mxu0
    %830 = vdwg.mxu0
    %v831 = vadd.f32 %v827, %v750
    %v832 = vmul.f32 %v831, %v104
    %v833 = vtanh.pop %v832
    %v834 = vmul.f32 %v833, %v104
    %v835 = vadd.f32 %v834, %v105
    %v836 = vmul.f32 %v835, %v701
    %838 = vrot.lane.b32.xlu0 %v835, 64
    %v839 = vpop.permute.xlu0 %838
    %v841 = vmul.f32 %v835, %v839
    %843 = vrot.lane.b32.xlu0 %v841, 32
    %v844 = vpop.permute.xlu0 %843
    %v846 = vadd.f32 %v836, %v844
    %v847 = vtanh.pop %v846
    %849 = vrot.lane.b32.xlu0 %v847, 64
    %v850 = vpop.permute.xlu0 %849
    %v852 = vmul.f32 %v835, %v850
    %v853 = vpack.c.bf16 %v852, %v852
    %855 = vrot.lane.b32.xlu0 %v853, 32
    %v856 = vpop.permute.xlu0 %855
    %v858 = vsel %vm193, %v856, 0
    %860 = vmatprep.subr.bf16.mxu0 0
    %861 = vmatpush1.bf16.msra.mxu0 %v272
    %862 = vmatprep.subr.bf16.mxu0 0
    %863 = vmatpush1.bf16.msra.mxu0 %v273
    %864 = vmatprep.subr.bf16.mxu0 0
    %865 = vmatpush1.bf16.msra.mxu0 0
    %866 = vmatprep.subr.bf16.mxu0 0
    %867 = vmatpush1.bf16.msra.mxu0 0
    %868 = vmatprep.subr.bf16.mxu0 0
    %869 = vmatpush1.bf16.msra.mxu0 0
    %870 = vmatprep.subr.bf16.mxu0 0
    %871 = vmatpush1.bf16.msra.mxu0 0
    %872 = vmatprep.subr.bf16.mxu0 0
    %873 = vmatpush1.bf16.msra.mxu0 0
    %874 = vmatprep.subr.bf16.mxu0 0
    %875 = vmatpush1.bf16.msra.mxu0 0
    %876 = vmatprep.subr.bf16.mxu0 0
    %877 = vmatpush1.bf16.msra.mxu0 0
    %878 = vmatprep.subr.bf16.mxu0 0
    %879 = vmatpush1.bf16.msra.mxu0 0
    %880 = vmatprep.subr.bf16.mxu0 0
    %881 = vmatpush1.bf16.msra.mxu0 0
    %882 = vmatprep.subr.bf16.mxu0 0
    %883 = vmatpush1.bf16.msra.mxu0 0
    %884 = vmatprep.subr.bf16.mxu0 0
    %885 = vmatpush1.bf16.msra.mxu0 0
    %886 = vmatprep.subr.bf16.mxu0 0
    %887 = vmatpush1.bf16.msra.mxu0 0
    %888 = vmatprep.subr.bf16.mxu0 0
    %889 = vmatpush1.bf16.msra.mxu0 0
    %890 = vmatprep.subr.bf16.mxu0 0
    %891 = vmatpush1.bf16.msra.mxu0 0
    %892 = vmatprep.mubr.bf16.mxu0 0
    %893 = vmatmul.mubr.bf16.gmra.mrb[0].mxu0 %v858
    %v894 = vpop.f32.mrb[0].mxu0
    %v895 = vadd.f32 %v106, %v894
    %v896 = vpop.f32.mrb[0].mxu0
    %v897 = vpop.f32.mrb[0].mxu0
    %v898 = vpop.f32.mrb[0].mxu0
    %899 = vdwg.mxu0
    %901 = vrot.lane.b32.xlu0 %v852, 32
    %v902 = vpop.permute.xlu0 %901
    %904 = vst.msk [vmem:[#allocation3 + $0x4] sm:$0x1] %vm323, %v902
    %v905 = vld [vmem:[#allocation2 + $0x5] sm:$0x1]
    %v906 = vadd.f32 %v905, %v825
    %v907 = vmul.f32 %v906, %v104
    %v908 = vtanh.pop %v907
    %v909 = vmul.f32 %v908, %v104
    %v910 = vadd.f32 %v909, %v105
    %v911 = vmul.f32 %v910, %v776
    %913 = vrot.lane.b32.xlu0 %v910, 64
    %v914 = vpop.permute.xlu0 %913
    %v916 = vmul.f32 %v910, %v914
    %918 = vrot.lane.b32.xlu0 %v916, 32
    %v919 = vpop.permute.xlu0 %918
    %v921 = vadd.f32 %v911, %v919
    %v922 = vtanh.pop %v921
    %924 = vrot.lane.b32.xlu0 %v922, 64
    %v925 = vpop.permute.xlu0 %924
    %v927 = vmul.f32 %v910, %v925
    %v928 = vpack.c.bf16 %v927, %v927
    %930 = vrot.lane.b32.xlu0 %v928, 32
    %v931 = vpop.permute.xlu0 %930
    %v933 = vsel %vm193, %v931, 0
    %935 = vmatprep.subr.bf16.mxu0 %v186
    %936 = vmatpush1.bf16.msra.mxu0 %v185
    %937 = vmatprep.subr.bf16.mxu0 %v188
    %938 = vmatpush1.bf16.msra.mxu0 %v187
    %939 = vmatprep.subr.bf16.mxu0 0
    %940 = vmatpush1.bf16.msra.mxu0 0
    %941 = vmatprep.subr.bf16.mxu0 0
    %942 = vmatpush1.bf16.msra.mxu0 0
    %943 = vmatprep.subr.bf16.mxu0 0
    %944 = vmatpush1.bf16.msra.mxu0 0
    %945 = vmatprep.subr.bf16.mxu0 0
    %946 = vmatpush1.bf16.msra.mxu0 0
    %947 = vmatprep.subr.bf16.mxu0 0
    %948 = vmatpush1.bf16.msra.mxu0 0
    %949 = vmatprep.subr.bf16.mxu0 0
    %950 = vmatpush1.bf16.msra.mxu0 0
    %951 = vmatprep.subr.bf16.mxu0 0
    %952 = vmatpush1.bf16.msra.mxu0 0
    %953 = vmatprep.subr.bf16.mxu0 0
    %954 = vmatpush1.bf16.msra.mxu0 0
    %955 = vmatprep.subr.bf16.mxu0 0
    %956 = vmatpush1.bf16.msra.mxu0 0
    %957 = vmatprep.subr.bf16.mxu0 0
    %958 = vmatpush1.bf16.msra.mxu0 0
    %959 = vmatprep.subr.bf16.mxu0 0
    %960 = vmatpush1.bf16.msra.mxu0 0
    %961 = vmatprep.subr.bf16.mxu0 0
    %962 = vmatpush1.bf16.msra.mxu0 0
    %963 = vmatprep.subr.bf16.mxu0 0
    %964 = vmatpush1.bf16.msra.mxu0 0
    %965 = vmatprep.subr.bf16.mxu0 0
    %966 = vmatpush1.bf16.msra.mxu0 0
    %967 = vmatprep.mubr.bf16.mxu0 0
    %968 = vmatmul.mubr.bf16.gmra.mrb[0].mxu0 %v933
    %v969 = vpop.f32.mrb[0].mxu0
    %v970 = vadd.f32 0.0, %v969
    %v971 = vpop.f32.mrb[0].mxu0
    %v972 = vadd.f32 0.0, %v971
    %v973 = vpop.f32.mrb[0].mxu0
    %v974 = vpop.f32.mrb[0].mxu0
    %975 = vdwg.mxu0
    %v976 = vadd.f32 %v972, %v895
    %v977 = vmul.f32 %v976, %v104
    %v978 = vtanh.pop %v977
    %v979 = vmul.f32 %v978, %v104
    %v980 = vadd.f32 %v979, %v105
    %v981 = vmul.f32 %v980, %v846
    %983 = vrot.lane.b32.xlu0 %v980, 64
    %v984 = vpop.permute.xlu0 %983
    %v986 = vmul.f32 %v980, %v984
    %988 = vrot.lane.b32.xlu0 %v986, 32
    %v989 = vpop.permute.xlu0 %988
    %v991 = vadd.f32 %v981, %v989
    %v992 = vtanh.pop %v991
    %994 = vrot.lane.b32.xlu0 %v992, 64
    %v995 = vpop.permute.xlu0 %994
    %v997 = vmul.f32 %v980, %v995
    %v998 = vpack.c.bf16 %v997, %v997
    %1000 = vrot.lane.b32.xlu0 %v998, 32
    %v1001 = vpop.permute.xlu0 %1000
    %v1003 = vsel %vm193, %v1001, 0
    %1005 = vmatprep.subr.bf16.mxu0 0
    %1006 = vmatpush1.bf16.msra.mxu0 %v272
    %1007 = vmatprep.subr.bf16.mxu0 0
    %1008 = vmatpush1.bf16.msra.mxu0 %v273
    %1009 = vmatprep.subr.bf16.mxu0 0
    %1010 = vmatpush1.bf16.msra.mxu0 0
    %1011 = vmatprep.subr.bf16.mxu0 0
    %1012 = vmatpush1.bf16.msra.mxu0 0
    %1013 = vmatprep.subr.bf16.mxu0 0
    %1014 = vmatpush1.bf16.msra.mxu0 0
    %1015 = vmatprep.subr.bf16.mxu0 0
    %1016 = vmatpush1.bf16.msra.mxu0 0
    %1017 = vmatprep.subr.bf16.mxu0 0
    %1018 = vmatpush1.bf16.msra.mxu0 0
    %1019 = vmatprep.subr.bf16.mxu0 0
    %1020 = vmatpush1.bf16.msra.mxu0 0
    %1021 = vmatprep.subr.bf16.mxu0 0
    %1022 = vmatpush1.bf16.msra.mxu0 0
    %1023 = vmatprep.subr.bf16.mxu0 0
    %1024 = vmatpush1.bf16.msra.mxu0 0
    %1025 = vmatprep.subr.bf16.mxu0 0
    %1026 = vmatpush1.bf16.msra.mxu0 0
    %1027 = vmatprep.subr.bf16.mxu0 0
    %1028 = vmatpush1.bf16.msra.mxu0 0
    %1029 = vmatprep.subr.bf16.mxu0 0
    %1030 = vmatpush1.bf16.msra.mxu0 0
    %1031 = vmatprep.subr.bf16.mxu0 0
    %1032 = vmatpush1.bf16.msra.mxu0 0
    %1033 = vmatprep.subr.bf16.mxu0 0
    %1034 = vmatpush1.bf16.msra.mxu0 0
    %1035 = vmatprep.subr.bf16.mxu0 0
    %1036 = vmatpush1.bf16.msra.mxu0 0
    %1037 = vmatprep.mubr.bf16.mxu0 0
    %1038 = vmatmul.mubr.bf16.gmra.mrb[0].mxu0 %v1003
    %v1039 = vpop.f32.mrb[0].mxu0
    %v1040 = vadd.f32 %v106, %v1039
    %v1041 = vpop.f32.mrb[0].mxu0
    %v1042 = vpop.f32.mrb[0].mxu0
    %v1043 = vpop.f32.mrb[0].mxu0
    %1044 = vdwg.mxu0
    %1046 = vrot.lane.b32.xlu0 %v997, 32
    %v1047 = vpop.permute.xlu0 %1046
    %1049 = vst.msk [vmem:[#allocation3 + $0x5] sm:$0x1] %vm323, %v1047
    %v1050 = vld [vmem:[#allocation2 + $0x6] sm:$0x1]
    %v1051 = vadd.f32 %v1050, %v970
    %v1052 = vmul.f32 %v1051, %v104
    %v1053 = vtanh.pop %v1052
    %v1054 = vmul.f32 %v1053, %v104
    %v1055 = vadd.f32 %v1054, %v105
    %v1056 = vmul.f32 %v1055, %v921
    %1058 = vrot.lane.b32.xlu0 %v1055, 64
    %v1059 = vpop.permute.xlu0 %1058
    %v1061 = vmul.f32 %v1055, %v1059
    %1063 = vrot.lane.b32.xlu0 %v1061, 32
    %v1064 = vpop.permute.xlu0 %1063
    %v1066 = vadd.f32 %v1056, %v1064
    %v1067 = vtanh.pop %v1066
    %1069 = vrot.lane.b32.xlu0 %v1067, 64
    %v1070 = vpop.permute.xlu0 %1069
    %v1072 = vmul.f32 %v1055, %v1070
    %v1073 = vpack.c.bf16 %v1072, %v1072
    %1075 = vrot.lane.b32.xlu0 %v1073, 32
    %v1076 = vpop.permute.xlu0 %1075
    %v1078 = vsel %vm193, %v1076, 0
    %1080 = vmatprep.subr.bf16.mxu0 %v186
    %1081 = vmatpush1.bf16.msra.mxu0 %v185
    %1082 = vmatprep.subr.bf16.mxu0 %v188
    %1083 = vmatpush1.bf16.msra.mxu0 %v187
    %1084 = vmatprep.subr.bf16.mxu0 0
    %1085 = vmatpush1.bf16.msra.mxu0 0
    %1086 = vmatprep.subr.bf16.mxu0 0
    %1087 = vmatpush1.bf16.msra.mxu0 0
    %1088 = vmatprep.subr.bf16.mxu0 0
    %1089 = vmatpush1.bf16.msra.mxu0 0
    %1090 = vmatprep.subr.bf16.mxu0 0
    %1091 = vmatpush1.bf16.msra.mxu0 0
    %1092 = vmatprep.subr.bf16.mxu0 0
    %1093 = vmatpush1.bf16.msra.mxu0 0
    %1094 = vmatprep.subr.bf16.mxu0 0
    %1095 = vmatpush1.bf16.msra.mxu0 0
    %1096 = vmatprep.subr.bf16.mxu0 0
    %1097 = vmatpush1.bf16.msra.mxu0 0
    %1098 = vmatprep.subr.bf16.mxu0 0
    %1099 = vmatpush1.bf16.msra.mxu0 0
    %1100 = vmatprep.subr.bf16.mxu0 0
    %1101 = vmatpush1.bf16.msra.mxu0 0
    %1102 = vmatprep.subr.bf16.mxu0 0
    %1103 = vmatpush1.bf16.msra.mxu0 0
    %1104 = vmatprep.subr.bf16.mxu0 0
    %1105 = vmatpush1.bf16.msra.mxu0 0
    %1106 = vmatprep.subr.bf16.mxu0 0
    %1107 = vmatpush1.bf16.msra.mxu0 0
    %1108 = vmatprep.subr.bf16.mxu0 0
    %1109 = vmatpush1.bf16.msra.mxu0 0
    %1110 = vmatprep.subr.bf16.mxu0 0
    %1111 = vmatpush1.bf16.msra.mxu0 0
    %1112 = vmatprep.mubr.bf16.mxu0 0
    %1113 = vmatmul.mubr.bf16.gmra.mrb[0].mxu0 %v1078
    %v1114 = vpop.f32.mrb[0].mxu0
    %v1115 = vadd.f32 0.0, %v1114
    %v1116 = vpop.f32.mrb[0].mxu0
    %v1117 = vadd.f32 0.0, %v1116
    %v1118 = vpop.f32.mrb[0].mxu0
    %v1119 = vpop.f32.mrb[0].mxu0
    %1120 = vdwg.mxu0
    %v1121 = vadd.f32 %v1117, %v1040
    %v1122 = vmul.f32 %v1121, %v104
    %v1123 = vtanh.pop %v1122
    %v1124 = vmul.f32 %v1123, %v104
    %v1125 = vadd.f32 %v1124, %v105
    %v1126 = vmul.f32 %v1125, %v991
    %1128 = vrot.lane.b32.xlu0 %v1125, 64
    %v1129 = vpop.permute.xlu0 %1128
    %v1131 = vmul.f32 %v1125, %v1129
    %1133 = vrot.lane.b32.xlu0 %v1131, 32
    %v1134 = vpop.permute.xlu0 %1133
    %v1136 = vadd.f32 %v1126, %v1134
    %v1137 = vtanh.pop %v1136
    %1139 = vrot.lane.b32.xlu0 %v1137, 64
    %v1140 = vpop.permute.xlu0 %1139
    %v1142 = vmul.f32 %v1125, %v1140
    %v1143 = vpack.c.bf16 %v1142, %v1142
    %1145 = vrot.lane.b32.xlu0 %v1143, 32
    %v1146 = vpop.permute.xlu0 %1145
    %v1148 = vsel %vm193, %v1146, 0
    %1150 = vmatprep.subr.bf16.mxu0 0
    %1151 = vmatpush1.bf16.msra.mxu0 %v272
    %1152 = vmatprep.subr.bf16.mxu0 0
    %1153 = vmatpush1.bf16.msra.mxu0 %v273
    %1154 = vmatprep.subr.bf16.mxu0 0
    %1155 = vmatpush1.bf16.msra.mxu0 0
    %1156 = vmatprep.subr.bf16.mxu0 0
    %1157 = vmatpush1.bf16.msra.mxu0 0
    %1158 = vmatprep.subr.bf16.mxu0 0
    %1159 = vmatpush1.bf16.msra.mxu0 0
    %1160 = vmatprep.subr.bf16.mxu0 0
    %1161 = vmatpush1.bf16.msra.mxu0 0
    %1162 = vmatprep.subr.bf16.mxu0 0
    %1163 = vmatpush1.bf16.msra.mxu0 0
    %1164 = vmatprep.subr.bf16.mxu0 0
    %1165 = vmatpush1.bf16.msra.mxu0 0
    %1166 = vmatprep.subr.bf16.mxu0 0
    %1167 = vmatpush1.bf16.msra.mxu0 0
    %1168 = vmatprep.subr.bf16.mxu0 0
    %1169 = vmatpush1.bf16.msra.mxu0 0
    %1170 = vmatprep.subr.bf16.mxu0 0
    %1171 = vmatpush1.bf16.msra.mxu0 0
    %1172 = vmatprep.subr.bf16.mxu0 0
    %1173 = vmatpush1.bf16.msra.mxu0 0
    %1174 = vmatprep.subr.bf16.mxu0 0
    %1175 = vmatpush1.bf16.msra.mxu0 0
    %1176 = vmatprep.subr.bf16.mxu0 0
    %1177 = vmatpush1.bf16.msra.mxu0 0
    %1178 = vmatprep.subr.bf16.mxu0 0
    %1179 = vmatpush1.bf16.msra.mxu0 0
    %1180 = vmatprep.subr.bf16.mxu0 0
    %1181 = vmatpush1.bf16.msra.mxu0 0
    %1182 = vmatprep.mubr.bf16.mxu0 0
    %1183 = vmatmul.mubr.bf16.gmra.mrb[0].mxu0 %v1148
    %v1184 = vpop.f32.mrb[0].mxu0
    %v1185 = vadd.f32 %v106, %v1184
    %v1186 = vpop.f32.mrb[0].mxu0
    %v1187 = vpop.f32.mrb[0].mxu0
    %v1188 = vpop.f32.mrb[0].mxu0
    %1189 = vdwg.mxu0
    %1191 = vrot.lane.b32.xlu0 %v1142, 32
    %v1192 = vpop.permute.xlu0 %1191
    %1194 = vst.msk [vmem:[#allocation3 + $0x6] sm:$0x1] %vm323, %v1192
    %v1195 = vld [vmem:[#allocation2 + $0x7] sm:$0x1]
    %v1196 = vadd.f32 %v1195, %v1115
    %v1197 = vmul.f32 %v1196, %v104
    %v1198 = vtanh.pop %v1197
    %v1199 = vmul.f32 %v1198, %v104
    %v1200 = vadd.f32 %v1199, %v105
    %v1201 = vmul.f32 %v1200, %v1066
    %1203 = vrot.lane.b32.xlu0 %v1200, 64
    %v1204 = vpop.permute.xlu0 %1203
    %v1206 = vmul.f32 %v1200, %v1204
    %1208 = vrot.lane.b32.xlu0 %v1206, 32
    %v1209 = vpop.permute.xlu0 %1208
    %v1211 = vadd.f32 %v1201, %v1209
    %v1212 = vtanh.pop %v1211
    %1214 = vrot.lane.b32.xlu0 %v1212, 64
    %v1215 = vpop.permute.xlu0 %1214
    %v1217 = vmul.f32 %v1200, %v1215
    %v1218 = vpack.c.bf16 %v1217, %v1217
    %1220 = vrot.lane.b32.xlu0 %v1218, 32
    %v1221 = vpop.permute.xlu0 %1220
    %v1223 = vsel %vm193, %v1221, 0
    %1225 = vmatprep.subr.bf16.mxu0 %v186
    %1226 = vmatpush1.bf16.msra.mxu0 %v185
    %1227 = vmatprep.subr.bf16.mxu0 %v188
    %1228 = vmatpush1.bf16.msra.mxu0 %v187
    %1229 = vmatprep.subr.bf16.mxu0 0
    %1230 = vmatpush1.bf16.msra.mxu0 0
    %1231 = vmatprep.subr.bf16.mxu0 0
    %1232 = vmatpush1.bf16.msra.mxu0 0
    %1233 = vmatprep.subr.bf16.mxu0 0
    %1234 = vmatpush1.bf16.msra.mxu0 0
    %1235 = vmatprep.subr.bf16.mxu0 0
    %1236 = vmatpush1.bf16.msra.mxu0 0
    %1237 = vmatprep.subr.bf16.mxu0 0
    %1238 = vmatpush1.bf16.msra.mxu0 0
    %1239 = vmatprep.subr.bf16.mxu0 0
    %1240 = vmatpush1.bf16.msra.mxu0 0
    %1241 = vmatprep.subr.bf16.mxu0 0
    %1242 = vmatpush1.bf16.msra.mxu0 0
    %1243 = vmatprep.subr.bf16.mxu0 0
    %1244 = vmatpush1.bf16.msra.mxu0 0
    %1245 = vmatprep.subr.bf16.mxu0 0
    %1246 = vmatpush1.bf16.msra.mxu0 0
    %1247 = vmatprep.subr.bf16.mxu0 0
    %1248 = vmatpush1.bf16.msra.mxu0 0
    %1249 = vmatprep.subr.bf16.mxu0 0
    %1250 = vmatpush1.bf16.msra.mxu0 0
    %1251 = vmatprep.subr.bf16.mxu0 0
    %1252 = vmatpush1.bf16.msra.mxu0 0
    %1253 = vmatprep.subr.bf16.mxu0 0
    %1254 = vmatpush1.bf16.msra.mxu0 0
    %1255 = vmatprep.subr.bf16.mxu0 0
    %1256 = vmatpush1.bf16.msra.mxu0 0
    %1257 = vmatprep.mubr.bf16.mxu0 0
    %1258 = vmatmul.mubr.bf16.gmra.mrb[0].mxu0 %v1223
    %v1259 = vpop.f32.mrb[0].mxu0
    %v1260 = vpop.f32.mrb[0].mxu0
    %v1261 = vadd.f32 0.0, %v1260
    %v1262 = vpop.f32.mrb[0].mxu0
    %v1263 = vpop.f32.mrb[0].mxu0
    %1264 = vdwg.mxu0
    %v1265 = vadd.f32 %v1261, %v1185
    %v1266 = vmul.f32 %v1265, %v104
    %v1267 = vtanh.pop %v1266
    %v1268 = vmul.f32 %v1267, %v104
    %v1269 = vadd.f32 %v1268, %v105
    %v1270 = vmul.f32 %v1269, %v1136
    %1272 = vrot.lane.b32.xlu0 %v1269, 64
    %v1273 = vpop.permute.xlu0 %1272
    %v1275 = vmul.f32 %v1269, %v1273
    %1277 = vrot.lane.b32.xlu0 %v1275, 32
    %v1278 = vpop.permute.xlu0 %1277
    %v1280 = vadd.f32 %v1270, %v1278
    %v1281 = vtanh.pop %v1280
    %1283 = vrot.lane.b32.xlu0 %v1281, 64
    %v1284 = vpop.permute.xlu0 %1283
    %v1286 = vmul.f32 %v1269, %v1284
    %1288 = vrot.lane.b32.xlu0 %v1286, 32
    %v1289 = vpop.permute.xlu0 %1288
    %1291 = vst.msk [vmem:[#allocation3 + $0x7] sm:$0x1] %vm323, %v1289
    %v1292 = vld [vmem:[%s9] sm:$0x1]
    %v1293 = vld [vmem:[#allocation3] sm:$0x1]
    %v1294 = vpack.c.bf16 %v1293, %v1293
    %v1295 = vld [vmem:[#allocation7] sm:$0xf]
    %v1296 = vld [vmem:[#allocation7 + $0x4] sm:$0xf]
    %v1297 = vld [vmem:[#allocation7 + $0x8] sm:$0xf]
    %v1298 = vld [vmem:[#allocation7 + $0xc] sm:$0xf]
    %v1303 = vunpack.c.l.b16 %v1295
    %v1304 = vunpack.c.l.b16 %v1296
    %v1305 = vunpack.c.l.b16 %v1297
    %v1306 = vunpack.c.l.b16 %v1298
    %v1307 = vpack.c.b16 %v1304, %v1303
    %v1308 = vpack.c.b16 %v1306, %v1305
    %v1312 = vsel %vm193, %v1294, 0
    %1314 = vmatprep.subr.bf16.mxu0 0
    %1315 = vmatpush1.bf16.msra.mxu0 %v1307
    %1316 = vmatprep.subr.bf16.mxu0 0
    %1317 = vmatpush1.bf16.msra.mxu0 %v1308
    %1318 = vmatprep.subr.bf16.mxu0 0
    %1319 = vmatpush1.bf16.msra.mxu0 0
    %1320 = vmatprep.subr.bf16.mxu0 0
    %1321 = vmatpush1.bf16.msra.mxu0 0
    %1322 = vmatprep.subr.bf16.mxu0 0
    %1323 = vmatpush1.bf16.msra.mxu0 0
    %1324 = vmatprep.subr.bf16.mxu0 0
    %1325 = vmatpush1.bf16.msra.mxu0 0
    %1326 = vmatprep.subr.bf16.mxu0 0
    %1327 = vmatpush1.bf16.msra.mxu0 0
    %1328 = vmatprep.subr.bf16.mxu0 0
    %1329 = vmatpush1.bf16.msra.mxu0 0
    %1330 = vmatprep.subr.bf16.mxu0 0
    %1331 = vmatpush1.bf16.msra.mxu0 0
    %1332 = vmatprep.subr.bf16.mxu0 0
    %1333 = vmatpush1.bf16.msra.mxu0 0
    %1334 = vmatprep.subr.bf16.mxu0 0
    %1335 = vmatpush1.bf16.msra.mxu0 0
    %1336 = vmatprep.subr.bf16.mxu0 0
    %1337 = vmatpush1.bf16.msra.mxu0 0
    %1338 = vmatprep.subr.bf16.mxu0 0
    %1339 = vmatpush1.bf16.msra.mxu0 0
    %1340 = vmatprep.subr.bf16.mxu0 0
    %1341 = vmatpush1.bf16.msra.mxu0 0
    %1342 = vmatprep.subr.bf16.mxu0 0
    %1343 = vmatpush1.bf16.msra.mxu0 0
    %1344 = vmatprep.subr.bf16.mxu0 0
    %1345 = vmatpush1.bf16.msra.mxu0 0
    %1346 = vmatprep.mubr.bf16.mxu0 0
    %1347 = vmatmul.mubr.bf16.gmra.mrb[0].mxu0 %v1312
    %v1348 = vpop.f32.mrb[0].mxu0
    %v1349 = vadd.f32 0.0, %v1348
    %v1350 = vpop.f32.mrb[0].mxu0
    %v1351 = vpop.f32.mrb[0].mxu0
    %v1352 = vpop.f32.mrb[0].mxu0
    %1353 = vdwg.mxu0
    %v1354 = vadd.f32 %v1292, %v1349
    %v1355 = vld [vmem:[#allocation3 + $0x1] sm:$0x1]
    %v1356 = vpack.c.bf16 %v1355, %v1355
    %s1357 = scalar_lea.vmem [#allocation7], 16
    %v1358 = vld [vmem:[%s1357] sm:$0xf]
    %v1359 = vld [vmem:[%s1357 + $0x4] sm:$0xf]
    %v1360 = vld [vmem:[%s1357 + $0x8] sm:$0xf]
    %v1361 = vld [vmem:[%s1357 + $0xc] sm:$0xf]
    %v1366 = vunpack.c.l.b16 %v1358
    %v1367 = vunpack.c.l.b16 %v1359
    %v1368 = vunpack.c.l.b16 %v1360
    %v1369 = vunpack.c.l.b16 %v1361
    %v1370 = vpack.c.b16 %v1367, %v1366
    %v1371 = vpack.c.b16 %v1369, %v1368
    %v1375 = vsel %vm193, %v1356, 0
    %1377 = vmatprep.subr.bf16.mxu0 0
    %1378 = vmatpush1.bf16.msra.mxu0 %v1370
    %1379 = vmatprep.subr.bf16.mxu0 0
    %1380 = vmatpush1.bf16.msra.mxu0 %v1371
    %1381 = vmatprep.subr.bf16.mxu0 0
    %1382 = vmatpush1.bf16.msra.mxu0 0
    %1383 = vmatprep.subr.bf16.mxu0 0
    %1384 = vmatpush1.bf16.msra.mxu0 0
    %1385 = vmatprep.subr.bf16.mxu0 0
    %1386 = vmatpush1.bf16.msra.mxu0 0
    %1387 = vmatprep.subr.bf16.mxu0 0
    %1388 = vmatpush1.bf16.msra.mxu0 0
    %1389 = vmatprep.subr.bf16.mxu0 0
    %1390 = vmatpush1.bf16.msra.mxu0 0
    %1391 = vmatprep.subr.bf16.mxu0 0
    %1392 = vmatpush1.bf16.msra.mxu0 0
    %1393 = vmatprep.subr.bf16.mxu0 0
    %1394 = vmatpush1.bf16.msra.mxu0 0
    %1395 = vmatprep.subr.bf16.mxu0 0
    %1396 = vmatpush1.bf16.msra.mxu0 0
    %1397 = vmatprep.subr.bf16.mxu0 0
    %1398 = vmatpush1.bf16.msra.mxu0 0
    %1399 = vmatprep.subr.bf16.mxu0 0
    %1400 = vmatpush1.bf16.msra.mxu0 0
    %1401 = vmatprep.subr.bf16.mxu0 0
    %1402 = vmatpush1.bf16.msra.mxu0 0
    %1403 = vmatprep.subr.bf16.mxu0 0
    %1404 = vmatpush1.bf16.msra.mxu0 0
    %1405 = vmatprep.subr.bf16.mxu0 0
    %1406 = vmatpush1.bf16.msra.mxu0 0
    %1407 = vmatprep.subr.bf16.mxu0 0
    %1408 = vmatpush1.bf16.msra.mxu0 0
    %1409 = vmatprep.mubr.bf16.mxu0 0
    %1410 = vmatmul.mubr.bf16.gmra.mrb[0].mxu0 %v1375
    %v1411 = vpop.f32.mrb[0].mxu0
    %v1412 = vadd.f32 0.0, %v1411
    %v1413 = vpop.f32.mrb[0].mxu0
    %v1414 = vpop.f32.mrb[0].mxu0
    %v1415 = vpop.f32.mrb[0].mxu0
    %1416 = vdwg.mxu0
    %v1417 = vadd.f32 %v1354, %v1412
    %v1418 = vld [vmem:[#allocation3 + $0x2] sm:$0x1]
    %v1419 = vpack.c.bf16 %v1418, %v1418
    %s1420 = scalar_lea.vmem [#allocation7], 32
    %v1421 = vld [vmem:[%s1420] sm:$0xf]
    %v1422 = vld [vmem:[%s1420 + $0x4] sm:$0xf]
    %v1423 = vld [vmem:[%s1420 + $0x8] sm:$0xf]
    %v1424 = vld [vmem:[%s1420 + $0xc] sm:$0xf]
    %v1429 = vunpack.c.l.b16 %v1421
    %v1430 = vunpack.c.l.b16 %v1422
    %v1431 = vunpack.c.l.b16 %v1423
    %v1432 = vunpack.c.l.b16 %v1424
    %v1433 = vpack.c.b16 %v1430, %v1429
    %v1434 = vpack.c.b16 %v1432, %v1431
    %v1438 = vsel %vm193, %v1419, 0
    %1440 = vmatprep.subr.bf16.mxu0 0
    %1441 = vmatpush1.bf16.msra.mxu0 %v1433
    %1442 = vmatprep.subr.bf16.mxu0 0
    %1443 = vmatpush1.bf16.msra.mxu0 %v1434
    %1444 = vmatprep.subr.bf16.mxu0 0
    %1445 = vmatpush1.bf16.msra.mxu0 0
    %1446 = vmatprep.subr.bf16.mxu0 0
    %1447 = vmatpush1.bf16.msra.mxu0 0
    %1448 = vmatprep.subr.bf16.mxu0 0
    %1449 = vmatpush1.bf16.msra.mxu0 0
    %1450 = vmatprep.subr.bf16.mxu0 0
    %1451 = vmatpush1.bf16.msra.mxu0 0
    %1452 = vmatprep.subr.bf16.mxu0 0
    %1453 = vmatpush1.bf16.msra.mxu0 0
    %1454 = vmatprep.subr.bf16.mxu0 0
    %1455 = vmatpush1.bf16.msra.mxu0 0
    %1456 = vmatprep.subr.bf16.mxu0 0
    %1457 = vmatpush1.bf16.msra.mxu0 0
    %1458 = vmatprep.subr.bf16.mxu0 0
    %1459 = vmatpush1.bf16.msra.mxu0 0
    %1460 = vmatprep.subr.bf16.mxu0 0
    %1461 = vmatpush1.bf16.msra.mxu0 0
    %1462 = vmatprep.subr.bf16.mxu0 0
    %1463 = vmatpush1.bf16.msra.mxu0 0
    %1464 = vmatprep.subr.bf16.mxu0 0
    %1465 = vmatpush1.bf16.msra.mxu0 0
    %1466 = vmatprep.subr.bf16.mxu0 0
    %1467 = vmatpush1.bf16.msra.mxu0 0
    %1468 = vmatprep.subr.bf16.mxu0 0
    %1469 = vmatpush1.bf16.msra.mxu0 0
    %1470 = vmatprep.subr.bf16.mxu0 0
    %1471 = vmatpush1.bf16.msra.mxu0 0
    %1472 = vmatprep.mubr.bf16.mxu0 0
    %1473 = vmatmul.mubr.bf16.gmra.mrb[0].mxu0 %v1438
    %v1474 = vpop.f32.mrb[0].mxu0
    %v1475 = vadd.f32 0.0, %v1474
    %v1476 = vpop.f32.mrb[0].mxu0
    %v1477 = vpop.f32.mrb[0].mxu0
    %v1478 = vpop.f32.mrb[0].mxu0
    %1479 = vdwg.mxu0
    %v1480 = vadd.f32 %v1417, %v1475
    %v1481 = vld [vmem:[#allocation3 + $0x3] sm:$0x1]
    %v1482 = vpack.c.bf16 %v1481, %v1481
    %s1483 = scalar_lea.vmem [#allocation7], 48
    %v1484 = vld [vmem:[%s1483] sm:$0xf]
    %v1485 = vld [vmem:[%s1483 + $0x4] sm:$0xf]
    %v1486 = vld [vmem:[%s1483 + $0x8] sm:$0xf]
    %v1487 = vld [vmem:[%s1483 + $0xc] sm:$0xf]
    %v1492 = vunpack.c.l.b16 %v1484
    %v1493 = vunpack.c.l.b16 %v1485
    %v1494 = vunpack.c.l.b16 %v1486
    %v1495 = vunpack.c.l.b16 %v1487
    %v1496 = vpack.c.b16 %v1493, %v1492
    %v1497 = vpack.c.b16 %v1495, %v1494
    %v1501 = vsel %vm193, %v1482, 0
    %1503 = vmatprep.subr.bf16.mxu0 0
    %1504 = vmatpush1.bf16.msra.mxu0 %v1496
    %1505 = vmatprep.subr.bf16.mxu0 0
    %1506 = vmatpush1.bf16.msra.mxu0 %v1497
    %1507 = vmatprep.subr.bf16.mxu0 0
    %1508 = vmatpush1.bf16.msra.mxu0 0
    %1509 = vmatprep.subr.bf16.mxu0 0
    %1510 = vmatpush1.bf16.msra.mxu0 0
    %1511 = vmatprep.subr.bf16.mxu0 0
    %1512 = vmatpush1.bf16.msra.mxu0 0
    %1513 = vmatprep.subr.bf16.mxu0 0
    %1514 = vmatpush1.bf16.msra.mxu0 0
    %1515 = vmatprep.subr.bf16.mxu0 0
    %1516 = vmatpush1.bf16.msra.mxu0 0
    %1517 = vmatprep.subr.bf16.mxu0 0
    %1518 = vmatpush1.bf16.msra.mxu0 0
    %1519 = vmatprep.subr.bf16.mxu0 0
    %1520 = vmatpush1.bf16.msra.mxu0 0
    %1521 = vmatprep.subr.bf16.mxu0 0
    %1522 = vmatpush1.bf16.msra.mxu0 0
    %1523 = vmatprep.subr.bf16.mxu0 0
    %1524 = vmatpush1.bf16.msra.mxu0 0
    %1525 = vmatprep.subr.bf16.mxu0 0
    %1526 = vmatpush1.bf16.msra.mxu0 0
    %1527 = vmatprep.subr.bf16.mxu0 0
    %1528 = vmatpush1.bf16.msra.mxu0 0
    %1529 = vmatprep.subr.bf16.mxu0 0
    %1530 = vmatpush1.bf16.msra.mxu0 0
    %1531 = vmatprep.subr.bf16.mxu0 0
    %1532 = vmatpush1.bf16.msra.mxu0 0
    %1533 = vmatprep.subr.bf16.mxu0 0
    %1534 = vmatpush1.bf16.msra.mxu0 0
    %1535 = vmatprep.mubr.bf16.mxu0 0
    %1536 = vmatmul.mubr.bf16.gmra.mrb[0].mxu0 %v1501
    %v1537 = vpop.f32.mrb[0].mxu0
    %v1538 = vadd.f32 0.0, %v1537
    %v1539 = vpop.f32.mrb[0].mxu0
    %v1540 = vpop.f32.mrb[0].mxu0
    %v1541 = vpop.f32.mrb[0].mxu0
    %1542 = vdwg.mxu0
    %v1543 = vadd.f32 %v1480, %v1538
    %v1544 = vld [vmem:[#allocation3 + $0x4] sm:$0x1]
    %v1545 = vpack.c.bf16 %v1544, %v1544
    %s1546 = scalar_lea.vmem [#allocation7], 64
    %v1547 = vld [vmem:[%s1546] sm:$0xf]
    %v1548 = vld [vmem:[%s1546 + $0x4] sm:$0xf]
    %v1549 = vld [vmem:[%s1546 + $0x8] sm:$0xf]
    %v1550 = vld [vmem:[%s1546 + $0xc] sm:$0xf]
    %v1555 = vunpack.c.l.b16 %v1547
    %v1556 = vunpack.c.l.b16 %v1548
    %v1557 = vunpack.c.l.b16 %v1549
    %v1558 = vunpack.c.l.b16 %v1550
    %v1559 = vpack.c.b16 %v1556, %v1555
    %v1560 = vpack.c.b16 %v1558, %v1557
    %v1564 = vsel %vm193, %v1545, 0
    %1566 = vmatprep.subr.bf16.mxu0 0
    %1567 = vmatpush1.bf16.msra.mxu0 %v1559
    %1568 = vmatprep.subr.bf16.mxu0 0
    %1569 = vmatpush1.bf16.msra.mxu0 %v1560
    %1570 = vmatprep.subr.bf16.mxu0 0
    %1571 = vmatpush1.bf16.msra.mxu0 0
    %1572 = vmatprep.subr.bf16.mxu0 0
    %1573 = vmatpush1.bf16.msra.mxu0 0
    %1574 = vmatprep.subr.bf16.mxu0 0
    %1575 = vmatpush1.bf16.msra.mxu0 0
    %1576 = vmatprep.subr.bf16.mxu0 0
    %1577 = vmatpush1.bf16.msra.mxu0 0
    %1578 = vmatprep.subr.bf16.mxu0 0
    %1579 = vmatpush1.bf16.msra.mxu0 0
    %1580 = vmatprep.subr.bf16.mxu0 0
    %1581 = vmatpush1.bf16.msra.mxu0 0
    %1582 = vmatprep.subr.bf16.mxu0 0
    %1583 = vmatpush1.bf16.msra.mxu0 0
    %1584 = vmatprep.subr.bf16.mxu0 0
    %1585 = vmatpush1.bf16.msra.mxu0 0
    %1586 = vmatprep.subr.bf16.mxu0 0
    %1587 = vmatpush1.bf16.msra.mxu0 0
    %1588 = vmatprep.subr.bf16.mxu0 0
    %1589 = vmatpush1.bf16.msra.mxu0 0
    %1590 = vmatprep.subr.bf16.mxu0 0
    %1591 = vmatpush1.bf16.msra.mxu0 0
    %1592 = vmatprep.subr.bf16.mxu0 0
    %1593 = vmatpush1.bf16.msra.mxu0 0
    %1594 = vmatprep.subr.bf16.mxu0 0
    %1595 = vmatpush1.bf16.msra.mxu0 0
    %1596 = vmatprep.subr.bf16.mxu0 0
    %1597 = vmatpush1.bf16.msra.mxu0 0
    %1598 = vmatprep.mubr.bf16.mxu0 0
    %1599 = vmatmul.mubr.bf16.gmra.mrb[0].mxu0 %v1564
    %v1600 = vpop.f32.mrb[0].mxu0
    %v1601 = vadd.f32 0.0, %v1600
    %v1602 = vpop.f32.mrb[0].mxu0
    %v1603 = vpop.f32.mrb[0].mxu0
    %v1604 = vpop.f32.mrb[0].mxu0
    %1605 = vdwg.mxu0
    %v1606 = vadd.f32 %v1543, %v1601
    %v1607 = vld [vmem:[#allocation3 + $0x5] sm:$0x1]
    %v1608 = vpack.c.bf16 %v1607, %v1607
    %s1609 = scalar_lea.vmem [#allocation7], 80
    %v1610 = vld [vmem:[%s1609] sm:$0xf]
    %v1611 = vld [vmem:[%s1609 + $0x4] sm:$0xf]
    %v1612 = vld [vmem:[%s1609 + $0x8] sm:$0xf]
    %v1613 = vld [vmem:[%s1609 + $0xc] sm:$0xf]
    %v1618 = vunpack.c.l.b16 %v1610
    %v1619 = vunpack.c.l.b16 %v1611
    %v1620 = vunpack.c.l.b16 %v1612
    %v1621 = vunpack.c.l.b16 %v1613
    %v1622 = vpack.c.b16 %v1619, %v1618
    %v1623 = vpack.c.b16 %v1621, %v1620
    %v1627 = vsel %vm193, %v1608, 0
    %1629 = vmatprep.subr.bf16.mxu0 0
    %1630 = vmatpush1.bf16.msra.mxu0 %v1622
    %1631 = vmatprep.subr.bf16.mxu0 0
    %1632 = vmatpush1.bf16.msra.mxu0 %v1623
    %1633 = vmatprep.subr.bf16.mxu0 0
    %1634 = vmatpush1.bf16.msra.mxu0 0
    %1635 = vmatprep.subr.bf16.mxu0 0
    %1636 = vmatpush1.bf16.msra.mxu0 0
    %1637 = vmatprep.subr.bf16.mxu0 0
    %1638 = vmatpush1.bf16.msra.mxu0 0
    %1639 = vmatprep.subr.bf16.mxu0 0
    %1640 = vmatpush1.bf16.msra.mxu0 0
    %1641 = vmatprep.subr.bf16.mxu0 0
    %1642 = vmatpush1.bf16.msra.mxu0 0
    %1643 = vmatprep.subr.bf16.mxu0 0
    %1644 = vmatpush1.bf16.msra.mxu0 0
    %1645 = vmatprep.subr.bf16.mxu0 0
    %1646 = vmatpush1.bf16.msra.mxu0 0
    %1647 = vmatprep.subr.bf16.mxu0 0
    %1648 = vmatpush1.bf16.msra.mxu0 0
    %1649 = vmatprep.subr.bf16.mxu0 0
    %1650 = vmatpush1.bf16.msra.mxu0 0
    %1651 = vmatprep.subr.bf16.mxu0 0
    %1652 = vmatpush1.bf16.msra.mxu0 0
    %1653 = vmatprep.subr.bf16.mxu0 0
    %1654 = vmatpush1.bf16.msra.mxu0 0
    %1655 = vmatprep.subr.bf16.mxu0 0
    %1656 = vmatpush1.bf16.msra.mxu0 0
    %1657 = vmatprep.subr.bf16.mxu0 0
    %1658 = vmatpush1.bf16.msra.mxu0 0
    %1659 = vmatprep.subr.bf16.mxu0 0
    %1660 = vmatpush1.bf16.msra.mxu0 0
    %1661 = vmatprep.mubr.bf16.mxu0 0
    %1662 = vmatmul.mubr.bf16.gmra.mrb[0].mxu0 %v1627
    %v1663 = vpop.f32.mrb[0].mxu0
    %v1664 = vadd.f32 0.0, %v1663
    %v1665 = vpop.f32.mrb[0].mxu0
    %v1666 = vpop.f32.mrb[0].mxu0
    %v1667 = vpop.f32.mrb[0].mxu0
    %1668 = vdwg.mxu0
    %v1669 = vadd.f32 %v1606, %v1664
    %v1670 = vld [vmem:[#allocation3 + $0x6] sm:$0x1]
    %v1671 = vpack.c.bf16 %v1670, %v1670
    %s1672 = scalar_lea.vmem [#allocation7], 96
    %v1673 = vld [vmem:[%s1672] sm:$0xf]
    %v1674 = vld [vmem:[%s1672 + $0x4] sm:$0xf]
    %v1675 = vld [vmem:[%s1672 + $0x8] sm:$0xf]
    %v1676 = vld [vmem:[%s1672 + $0xc] sm:$0xf]
    %v1681 = vunpack.c.l.b16 %v1673
    %v1682 = vunpack.c.l.b16 %v1674
    %v1683 = vunpack.c.l.b16 %v1675
    %v1684 = vunpack.c.l.b16 %v1676
    %v1685 = vpack.c.b16 %v1682, %v1681
    %v1686 = vpack.c.b16 %v1684, %v1683
    %v1690 = vsel %vm193, %v1671, 0
    %1692 = vmatprep.subr.bf16.mxu0 0
    %1693 = vmatpush1.bf16.msra.mxu0 %v1685
    %1694 = vmatprep.subr.bf16.mxu0 0
    %1695 = vmatpush1.bf16.msra.mxu0 %v1686
    %1696 = vmatprep.subr.bf16.mxu0 0
    %1697 = vmatpush1.bf16.msra.mxu0 0
    %1698 = vmatprep.subr.bf16.mxu0 0
    %1699 = vmatpush1.bf16.msra.mxu0 0
    %1700 = vmatprep.subr.bf16.mxu0 0
    %1701 = vmatpush1.bf16.msra.mxu0 0
    %1702 = vmatprep.subr.bf16.mxu0 0
    %1703 = vmatpush1.bf16.msra.mxu0 0
    %1704 = vmatprep.subr.bf16.mxu0 0
    %1705 = vmatpush1.bf16.msra.mxu0 0
    %1706 = vmatprep.subr.bf16.mxu0 0
    %1707 = vmatpush1.bf16.msra.mxu0 0
    %1708 = vmatprep.subr.bf16.mxu0 0
    %1709 = vmatpush1.bf16.msra.mxu0 0
    %1710 = vmatprep.subr.bf16.mxu0 0
    %1711 = vmatpush1.bf16.msra.mxu0 0
    %1712 = vmatprep.subr.bf16.mxu0 0
    %1713 = vmatpush1.bf16.msra.mxu0 0
    %1714 = vmatprep.subr.bf16.mxu0 0
    %1715 = vmatpush1.bf16.msra.mxu0 0
    %1716 = vmatprep.subr.bf16.mxu0 0
    %1717 = vmatpush1.bf16.msra.mxu0 0
    %1718 = vmatprep.subr.bf16.mxu0 0
    %1719 = vmatpush1.bf16.msra.mxu0 0
    %1720 = vmatprep.subr.bf16.mxu0 0
    %1721 = vmatpush1.bf16.msra.mxu0 0
    %1722 = vmatprep.subr.bf16.mxu0 0
    %1723 = vmatpush1.bf16.msra.mxu0 0
    %1724 = vmatprep.mubr.bf16.mxu0 0
    %1725 = vmatmul.mubr.bf16.gmra.mrb[0].mxu0 %v1690
    %v1726 = vpop.f32.mrb[0].mxu0
    %v1727 = vadd.f32 0.0, %v1726
    %v1728 = vpop.f32.mrb[0].mxu0
    %v1729 = vpop.f32.mrb[0].mxu0
    %v1730 = vpop.f32.mrb[0].mxu0
    %1731 = vdwg.mxu0
    %v1732 = vadd.f32 %v1669, %v1727
    %v1733 = vld [vmem:[#allocation3 + $0x7] sm:$0x1]
    %v1734 = vpack.c.bf16 %v1733, %v1733
    %s1735 = scalar_lea.vmem [#allocation7], 112
    %v1736 = vld [vmem:[%s1735] sm:$0xf]
    %v1737 = vld [vmem:[%s1735 + $0x4] sm:$0xf]
    %v1738 = vld [vmem:[%s1735 + $0x8] sm:$0xf]
    %v1739 = vld [vmem:[%s1735 + $0xc] sm:$0xf]
    %v1744 = vunpack.c.l.b16 %v1736
    %v1745 = vunpack.c.l.b16 %v1737
    %v1746 = vunpack.c.l.b16 %v1738
    %v1747 = vunpack.c.l.b16 %v1739
    %v1748 = vpack.c.b16 %v1745, %v1744
    %v1749 = vpack.c.b16 %v1747, %v1746
    %v1753 = vsel %vm193, %v1734, 0
    %1755 = vmatprep.subr.bf16.mxu0 0
    %1756 = vmatpush1.bf16.msra.mxu0 %v1748
    %1757 = vmatprep.subr.bf16.mxu0 0
    %1758 = vmatpush1.bf16.msra.mxu0 %v1749
    %1759 = vmatprep.subr.bf16.mxu0 0
    %1760 = vmatpush1.bf16.msra.mxu0 0
    %1761 = vmatprep.subr.bf16.mxu0 0
    %1762 = vmatpush1.bf16.msra.mxu0 0
    %1763 = vmatprep.subr.bf16.mxu0 0
    %1764 = vmatpush1.bf16.msra.mxu0 0
    %1765 = vmatprep.subr.bf16.mxu0 0
    %1766 = vmatpush1.bf16.msra.mxu0 0
    %1767 = vmatprep.subr.bf16.mxu0 0
    %1768 = vmatpush1.bf16.msra.mxu0 0
    %1769 = vmatprep.subr.bf16.mxu0 0
    %1770 = vmatpush1.bf16.msra.mxu0 0
    %1771 = vmatprep.subr.bf16.mxu0 0
    %1772 = vmatpush1.bf16.msra.mxu0 0
    %1773 = vmatprep.subr.bf16.mxu0 0
    %1774 = vmatpush1.bf16.msra.mxu0 0
    %1775 = vmatprep.subr.bf16.mxu0 0
    %1776 = vmatpush1.bf16.msra.mxu0 0
    %1777 = vmatprep.subr.bf16.mxu0 0
    %1778 = vmatpush1.bf16.msra.mxu0 0
    %1779 = vmatprep.subr.bf16.mxu0 0
    %1780 = vmatpush1.bf16.msra.mxu0 0
    %1781 = vmatprep.subr.bf16.mxu0 0
    %1782 = vmatpush1.bf16.msra.mxu0 0
    %1783 = vmatprep.subr.bf16.mxu0 0
    %1784 = vmatpush1.bf16.msra.mxu0 0
    %1785 = vmatprep.subr.bf16.mxu0 0
    %1786 = vmatpush1.bf16.msra.mxu0 0
    %1787 = vmatprep.mubr.bf16.mxu0 0
    %1788 = vmatmul.mubr.bf16.gmra.mrb[0].mxu0 %v1753
    %v1789 = vpop.f32.mrb[0].mxu0
    %v1790 = vadd.f32 0.0, %v1789
    %v1791 = vpop.f32.mrb[0].mxu0
    %v1792 = vpop.f32.mrb[0].mxu0
    %v1793 = vpop.f32.mrb[0].mxu0
    %1794 = vdwg.mxu0
    %v1795 = vadd.f32 %v1732, %v1790
    %vm1796 = vcmp.gt.f32.partialorder %v1795, 20.0
    %v1797 = vmin.f32 %v1795, 20.0
    %v1798 = vmul.f32 %v1797, 1.442695
    %v1799 = vpow.pop %v1798
    %v1800 = vadd.f32 %v1799, 1.0
    %v1801 = vlog2.pop %v1800
    %v1802 = vmul.f32 %v1801, 0.6931472
    %v1803 = vsel %vm1796, %v1795, %v1802
    %v1804 = vpack.c.bf16 %v1803, %v1803
    %v1805 = vld [vmem:[#allocation9] sm:$0xf]
    %v1806 = vld [vmem:[#allocation9 + $0x4] sm:$0xf]
    %v1807 = vld [vmem:[#allocation9 + $0x8] sm:$0xf]
    %v1808 = vld [vmem:[#allocation9 + $0xc] sm:$0xf]
    %v1809 = vld [vmem:[#allocation9 + $0x10] sm:$0xf]
    %v1810 = vld [vmem:[#allocation9 + $0x14] sm:$0xf]
    %v1811 = vld [vmem:[#allocation9 + $0x18] sm:$0xf]
    %v1812 = vld [vmem:[#allocation9 + $0x1c] sm:$0xf]
    %v1813 = vld [vmem:[#allocation9 + $0x20] sm:$0xf]
    %v1814 = vld [vmem:[#allocation9 + $0x24] sm:$0xf]
    %v1815 = vld [vmem:[#allocation9 + $0x28] sm:$0xf]
    %v1816 = vld [vmem:[#allocation9 + $0x2c] sm:$0xf]
    %v1817 = vld [vmem:[#allocation9 + $0x30] sm:$0xf]
    %v1818 = vld [vmem:[#allocation9 + $0x34] sm:$0xf]
    %v1819 = vld [vmem:[#allocation9 + $0x38] sm:$0xf]
    %v1820 = vld [vmem:[#allocation9 + $0x3c] sm:$0xf]
    %v1821 = vld [vmem:[%s11] sm:$0x1]
    %v1838 = vunpack.c.l.b16 %v1805
    %v1839 = vunpack.c.l.b16 %v1806
    %v1840 = vunpack.c.l.b16 %v1807
    %v1841 = vunpack.c.l.b16 %v1808
    %v1842 = vunpack.c.l.b16 %v1809
    %v1843 = vunpack.c.l.b16 %v1810
    %v1844 = vunpack.c.l.b16 %v1811
    %v1845 = vunpack.c.l.b16 %v1812
    %v1846 = vunpack.c.l.b16 %v1813
    %v1847 = vunpack.c.l.b16 %v1814
    %v1848 = vunpack.c.l.b16 %v1815
    %v1849 = vunpack.c.l.b16 %v1816
    %v1850 = vunpack.c.l.b16 %v1817
    %v1851 = vunpack.c.l.b16 %v1818
    %v1852 = vunpack.c.l.b16 %v1819
    %v1853 = vunpack.c.l.b16 %v1820
    %v1854 = vpack.c.b16 %v1839, %v1838
    %v1855 = vpack.c.b16 %v1841, %v1840
    %v1856 = vpack.c.b16 %v1843, %v1842
    %v1857 = vpack.c.b16 %v1845, %v1844
    %v1858 = vpack.c.b16 %v1847, %v1846
    %v1859 = vpack.c.b16 %v1849, %v1848
    %v1860 = vpack.c.b16 %v1851, %v1850
    %v1861 = vpack.c.b16 %v1853, %v1852
    %1870 = vmatprep.subr.bf16.mxu0 0
    %1871 = vmatpush1.bf16.msra.mxu0 %v1854
    %1872 = vmatprep.subr.bf16.mxu0 0
    %1873 = vmatpush1.bf16.msra.mxu0 %v1855
    %1874 = vmatprep.subr.bf16.mxu0 0
    %1875 = vmatpush1.bf16.msra.mxu0 %v1856
    %1876 = vmatprep.subr.bf16.mxu0 0
    %1877 = vmatpush1.bf16.msra.mxu0 %v1857
    %1878 = vmatprep.subr.bf16.mxu0 0
    %1879 = vmatpush1.bf16.msra.mxu0 %v1858
    %1880 = vmatprep.subr.bf16.mxu0 0
    %1881 = vmatpush1.bf16.msra.mxu0 %v1859
    %1882 = vmatprep.subr.bf16.mxu0 0
    %1883 = vmatpush1.bf16.msra.mxu0 %v1860
    %1884 = vmatprep.subr.bf16.mxu0 0
    %1885 = vmatpush1.bf16.msra.mxu0 %v1861
    %1886 = vmatprep.subr.bf16.mxu0 0
    %1887 = vmatpush1.bf16.msra.mxu0 0
    %1888 = vmatprep.subr.bf16.mxu0 0
    %1889 = vmatpush1.bf16.msra.mxu0 0
    %1890 = vmatprep.subr.bf16.mxu0 0
    %1891 = vmatpush1.bf16.msra.mxu0 0
    %1892 = vmatprep.subr.bf16.mxu0 0
    %1893 = vmatpush1.bf16.msra.mxu0 0
    %1894 = vmatprep.subr.bf16.mxu0 0
    %1895 = vmatpush1.bf16.msra.mxu0 0
    %1896 = vmatprep.subr.bf16.mxu0 0
    %1897 = vmatpush1.bf16.msra.mxu0 0
    %1898 = vmatprep.subr.bf16.mxu0 0
    %1899 = vmatpush1.bf16.msra.mxu0 0
    %1900 = vmatprep.subr.bf16.mxu0 0
    %1901 = vmatpush1.bf16.msra.mxu0 0
    %1902 = vmatprep.mubr.bf16.mxu0 0
    %1903 = vmatmul.mubr.bf16.gmra.mrb[0].mxu0 %v1804
    %v1904 = vpop.f32.mrb[0].mxu0
    %v1905 = vadd.f32 %v1821, %v1904
    %v1906 = vpop.f32.mrb[0].mxu0
    %v1907 = vpop.f32.mrb[0].mxu0
    %v1908 = vpop.f32.mrb[0].mxu0
    %1909 = vdwg.mxu0
    %vm1910 = vcmp.gt.f32.partialorder %v1905, 20.0
    %v1911 = vmin.f32 %v1905, 20.0
    %v1912 = vmul.f32 %v1911, 1.442695
    %v1913 = vpow.pop %v1912
    %v1914 = vadd.f32 %v1913, 1.0
    %v1915 = vlog2.pop %v1914
    %v1916 = vmul.f32 %v1915, 0.6931472
    %v1917 = vsel %vm1910, %v1905, %v1916
    %v1918 = vpack.c.bf16 %v1917, %v1917
    %v1919 = vld [vmem:[#allocation10] sm:$0xf]
    %v1920 = vld [vmem:[#allocation10 + $0x4] sm:$0xf]
    %v1921 = vld [vmem:[#allocation10 + $0x8] sm:$0xf]
    %v1922 = vld [vmem:[#allocation10 + $0xc] sm:$0xf]
    %v1923 = vld [vmem:[#allocation10 + $0x10] sm:$0xf]
    %v1924 = vld [vmem:[#allocation10 + $0x14] sm:$0xf]
    %v1925 = vld [vmem:[#allocation10 + $0x18] sm:$0xf]
    %v1926 = vld [vmem:[#allocation10 + $0x1c] sm:$0xf]
    %v1927 = vld [vmem:[#allocation10 + $0x20] sm:$0xf]
    %v1928 = vld [vmem:[#allocation10 + $0x24] sm:$0xf]
    %v1929 = vld [vmem:[#allocation10 + $0x28] sm:$0xf]
    %v1930 = vld [vmem:[#allocation10 + $0x2c] sm:$0xf]
    %v1931 = vld [vmem:[#allocation10 + $0x30] sm:$0xf]
    %v1932 = vld [vmem:[#allocation10 + $0x34] sm:$0xf]
    %v1933 = vld [vmem:[#allocation10 + $0x38] sm:$0xf]
    %v1934 = vld [vmem:[#allocation10 + $0x3c] sm:$0xf]
    %v1935 = vld [vmem:[%s13] sm:$0x1]
    %v1952 = vunpack.c.l.b16 %v1919
    %v1953 = vunpack.c.l.b16 %v1920
    %v1954 = vunpack.c.l.b16 %v1921
    %v1955 = vunpack.c.l.b16 %v1922
    %v1956 = vunpack.c.l.b16 %v1923
    %v1957 = vunpack.c.l.b16 %v1924
    %v1958 = vunpack.c.l.b16 %v1925
    %v1959 = vunpack.c.l.b16 %v1926
    %v1960 = vunpack.c.l.b16 %v1927
    %v1961 = vunpack.c.l.b16 %v1928
    %v1962 = vunpack.c.l.b16 %v1929
    %v1963 = vunpack.c.l.b16 %v1930
    %v1964 = vunpack.c.l.b16 %v1931
    %v1965 = vunpack.c.l.b16 %v1932
    %v1966 = vunpack.c.l.b16 %v1933
    %v1967 = vunpack.c.l.b16 %v1934
    %v1968 = vpack.c.b16 %v1953, %v1952
    %v1969 = vpack.c.b16 %v1955, %v1954
    %v1970 = vpack.c.b16 %v1957, %v1956
    %v1971 = vpack.c.b16 %v1959, %v1958
    %v1972 = vpack.c.b16 %v1961, %v1960
    %v1973 = vpack.c.b16 %v1963, %v1962
    %v1974 = vpack.c.b16 %v1965, %v1964
    %v1975 = vpack.c.b16 %v1967, %v1966
    %1984 = vmatprep.subr.bf16.mxu0 0
    %1985 = vmatpush1.bf16.msra.mxu0 %v1968
    %1986 = vmatprep.subr.bf16.mxu0 0
    %1987 = vmatpush1.bf16.msra.mxu0 %v1969
    %1988 = vmatprep.subr.bf16.mxu0 0
    %1989 = vmatpush1.bf16.msra.mxu0 %v1970
    %1990 = vmatprep.subr.bf16.mxu0 0
    %1991 = vmatpush1.bf16.msra.mxu0 %v1971
    %1992 = vmatprep.subr.bf16.mxu0 0
    %1993 = vmatpush1.bf16.msra.mxu0 %v1972
    %1994 = vmatprep.subr.bf16.mxu0 0
    %1995 = vmatpush1.bf16.msra.mxu0 %v1973
    %1996 = vmatprep.subr.bf16.mxu0 0
    %1997 = vmatpush1.bf16.msra.mxu0 %v1974
    %1998 = vmatprep.subr.bf16.mxu0 0
    %1999 = vmatpush1.bf16.msra.mxu0 %v1975
    %2000 = vmatprep.subr.bf16.mxu0 0
    %2001 = vmatpush1.bf16.msra.mxu0 0
    %2002 = vmatprep.subr.bf16.mxu0 0
    %2003 = vmatpush1.bf16.msra.mxu0 0
    %2004 = vmatprep.subr.bf16.mxu0 0
    %2005 = vmatpush1.bf16.msra.mxu0 0
    %2006 = vmatprep.subr.bf16.mxu0 0
    %2007 = vmatpush1.bf16.msra.mxu0 0
    %2008 = vmatprep.subr.bf16.mxu0 0
    %2009 = vmatpush1.bf16.msra.mxu0 0
    %2010 = vmatprep.subr.bf16.mxu0 0
    %2011 = vmatpush1.bf16.msra.mxu0 0
    %2012 = vmatprep.subr.bf16.mxu0 0
    %2013 = vmatpush1.bf16.msra.mxu0 0
    %2014 = vmatprep.subr.bf16.mxu0 0
    %2015 = vmatpush1.bf16.msra.mxu0 0
    %2016 = vmatprep.mubr.bf16.mxu0 0
    %2017 = vmatmul.mubr.bf16.gmra.mrb[0].mxu0 %v1918
    %v2018 = vpop.f32.mrb[0].mxu0
    %v2019 = vadd.f32 %v1935, %v2018
    %v2020 = vpop.f32.mrb[0].mxu0
    %v2021 = vpop.f32.mrb[0].mxu0
    %v2022 = vpop.f32.mrb[0].mxu0
    %2023 = vdwg.mxu0
    %2024 = vst [vmem:[#allocation12] sm:$0x1] %v2019
    // Predicated region
    $region74: #{tpu_custom_call.1} parent=1 // pred_check
      _
    $region75: #{tpu_custom_call.1} parent=1 // pred_check_branch
      %2026 = sbr.rel (0) target = $region77
    $region76: #{tpu_custom_call.1} parent=1 // pred_region
      %s2028 = ssub.s32 16, 16
      %2029 = vsyncadd [#allocation6], %s2028
      %s2031 = sshll.u32 [#allocation12], 4
      %s2032 = int_to_ptr.vmem [resolvable:$true] %s2031
      %2034 = dma.vmem_to_hbm [thread:$0]  %s2032, 16, %s14, [#allocation6]
    $region77: #{tpu_custom_call.1} parent=1 // pred_fallthru
      _
    // Predicated region
    $region78: #{tpu_custom_call.1} parent=1 // pred_check
      _
    $region79: #{tpu_custom_call.1} parent=1 // pred_check_branch
      %2036 = sbr.rel (0) target = $region81
    $region80: #{tpu_custom_call.1} parent=1 // pred_region
      %2037 = dma.done [#allocation6], 16
    $region81: #{tpu_custom_call.1} parent=1 // pred_fallthru
      _
    %2038 = vsyncpa [#allocation5], 1
    %2039 = vsyncpa [#allocation8], 1
    %2040 = vsyncpa [#allocation11], 1
    %2041 = vsyncpa [#allocation6], 1

</llo_original>
